<compile_context>
chip_gen: v6e
topology: v6e:2x2x1
jax: 0.10.0
libtpu: 0.0.40
codegen_flags: <defaults>
</compile_context>

<pallas_src>
import functools

import jax
import jax.numpy as jnp
from jax.experimental import pallas as pl
from jax.experimental.pallas import tpu as pltpu

BN_EPS = 1e-5
NUM_GCN = 4
NUM_DEC_HIDDEN = 3
NUM_LAYERS = NUM_GCN + NUM_DEC_HIDDEN + 1   # 4 GCN + 3 decoder hidden + 1 out


# ------------------------------ fused kernel ------------------------------- #

def _gnn_fused_kernel(a_ref, x_ref, w_ref, b_ref, o_ref, *, padw):
    """One grid step == one graph.
    a_ref : (N, N)        bf16   symmetric-normalized adjacency
    x_ref : (N, padw)     bf16   node features, zero-padded to 128 lanes
    w_ref : (8*padw,padw) bf16   packed weights, layer l = rows [l*padw,(l+1)*padw)
    b_ref : (8, padw)     f32    packed biases, layer l = row l (BN pre-folded)
    o_ref : (8, padw)     f32    result broadcast to a full vreg; col 0 is y
    Everything stays in VMEM; intermediates never touch HBM."""
    a = a_ref[...]                                   # (N, N) bf16
    h = x_ref[...]                                   # (N, padw) bf16
    h32 = None

    # --- 4 x (GCNConv + ReLU):  relu((A_hat @ H) @ W + b) ---
    for l in range(NUM_GCN):
        w = w_ref[l * padw:(l + 1) * padw, :]        # static slice, bf16
        b = b_ref[l:l + 1, :]                        # (1, padw) f32
        ah = jnp.dot(a, h, preferred_element_type=jnp.float32)
        z = jnp.dot(ah.astype(jnp.bfloat16), w,
                    preferred_element_type=jnp.float32)
        h32 = jnp.maximum(z + b, 0.0)                # f32 elementwise (v5e VPU)
        h = h32.astype(jnp.bfloat16)                 # bf16 only for the MXU

    # --- global max pool over nodes (batch_ind=None -> single graph) ---
    x = jnp.max(h32, axis=0, keepdims=True)          # (1, padw) f32

    # --- decoder hidden layers: relu(x @ W' + b'), BN folded into W'/b' ---
    for l in range(NUM_GCN, NUM_GCN + NUM_DEC_HIDDEN):
        w = w_ref[l * padw:(l + 1) * padw, :]
        b = b_ref[l:l + 1, :]
        z = jnp.dot(x.astype(jnp.bfloat16), w,
                    preferred_element_type=jnp.float32)
        x = jnp.maximum(z + b, 0.0)

    # --- final Linear(F, 1) (real result in column 0) ---
    l = NUM_GCN + NUM_DEC_HIDDEN
    w = w_ref[l * padw:(l + 1) * padw, :]
    b = b_ref[l:l + 1, :]
    y = jnp.dot(x.astype(jnp.bfloat16), w,
                preferred_element_type=jnp.float32) + b
    o_ref[...] = jnp.broadcast_to(y, o_ref.shape)    # single full-vreg store


# ------------------------------ param packing ------------------------------ #

def pack_params(params, input_fea):
    """Pack all layer weights/biases into two flat, lane-dense VMEM slabs.
    Each weight occupies a (padw, padw) slot (zero padded); zero padding in
    W columns / bias entries keeps padded activations exactly 0, so the
    padded math equals the unpadded math."""
    f = input_fea
    padw = max(128, ((8 * f + 127) // 128) * 128)
    layers = list(params["gcn"]) + list(params["dec_hidden"]) + [params["dec_out"]]
    assert len(layers) == NUM_LAYERS
    w_blocks, b_rows = [], []
    for (w, b) in layers:
        w_blocks.append(jnp.pad(w, ((0, padw - w.shape[0]),
                                    (0, padw - w.shape[1]))))
        b_rows.append(jnp.pad(b, ((0, 0), (0, padw - b.shape[1]))))
    w_pack = jnp.concatenate(w_blocks, axis=0).astype(jnp.bfloat16)  # (8*padw, padw)
    b_pack = jnp.concatenate(b_rows, axis=0).astype(jnp.float32)     # (8, padw)
    return w_pack, b_pack, padw


# ------------------------------- call wrapper ------------------------------ #

def gnn_forward(params, x1, a_hat):
    """x1: (B, N, F) f32 node features; a_hat: (B, N, N) f32 normalized adj.
    Returns (B, 1) f32 — one prediction per graph."""
    B, N, F = x1.shape
    w_pack, b_pack, padw = pack_params(params, F)

    # bf16 MXU operands, lane-dense feature padding (f32 accumulation in-kernel)
    x_pad = jnp.pad(x1, ((0, 0), (0, 0), (0, padw - F))).astype(jnp.bfloat16)
    a_bf = a_hat.astype(jnp.bfloat16)

    kernel = functools.partial(_gnn_fused_kernel, padw=padw)

    out = pl.pallas_call(
        kernel,
        out_shape=jax.ShapeDtypeStruct((B, 8, padw), jnp.float32),
        grid=(B,),
        in_specs=[
            # per-graph operands, streamed by the batch grid
            pl.BlockSpec((None, N, N), lambda b: (b, 0, 0)),
            pl.BlockSpec((None, N, padw), lambda b: (b, 0, 0)),
            # packed params: constant index map -> VMEM-resident across the grid
            pl.BlockSpec((NUM_LAYERS * padw, padw), lambda b: (0, 0)),
            pl.BlockSpec((NUM_LAYERS, padw), lambda b: (0, 0)),
        ],
        out_specs=pl.BlockSpec((None, 8, padw), lambda b: (b, 0, 0)),
        compiler_params=pltpu.CompilerParams(
            # batch axis is independent across graphs -> megacore / 2nd TC on v7x
            dimension_semantics=("parallel",),
            # Explicit budget: full A_hat residency only holds for small/medium N
            # (bf16 A_hat alone is ~N^2*2 bytes); fails loudly instead of OOMing.
            vmem_limit_bytes=32 * 1024 * 1024,
        ),
    )(a_bf, x_pad, w_pack, b_pack)

    return out[:, 0, :1]                              # (B, 1)


# --------------------------- glue: graph / params -------------------------- #

def build_norm_adj(edge_index, num_nodes):
    """Dense A_hat = D^-1/2 (A + I_remaining) D^-1/2, PyG GCNConv convention
    (edge_index[0]=source j, edge_index[1]=target i, A[i,j]=1).  Self-loops are
    only added to nodes that do not already have one (add_remaining_self_loops)."""
    src, dst = edge_index[0], edge_index[1]
    a = jnp.zeros((num_nodes, num_nodes), jnp.float32)
    a = a.at[dst, src].add(1.0)
    diag = jnp.diagonal(a)
    a = a + jnp.diag(jnp.where(diag > 0.0, 0.0, 1.0))
    deg = jnp.sum(a, axis=1)
    dinv = jnp.where(deg > 0, 1.0 / jnp.sqrt(deg), 0.0)
    return dinv[:, None] * a * dinv[None, :]


def _glorot(key, shape):
    fan_in, fan_out = shape
    limit = jnp.sqrt(6.0 / (fan_in + fan_out))
    return jax.random.uniform(key, shape, jnp.float32, -limit, limit)


def _fold_bn(w, b, gamma, beta, mean, var):
    """Fold eval-mode BatchNorm1d into the preceding Linear:
       ((xW + b) - mean) * gamma/sqrt(var+eps) + beta  ==  x W' + b'."""
    scale = gamma / jnp.sqrt(var + BN_EPS)            # (1, dout)
    return w * scale, (b - mean) * scale + beta


def init_params(key, input_fea):
    f = input_fea
    gcn_dims = [(f, 2 * f), (2 * f, 4 * f), (4 * f, 6 * f), (6 * f, 8 * f)]
    dec_hidden_dims = [(8 * f, 4 * f), (4 * f, 2 * f), (2 * f, f)]

    keys = jax.random.split(key, 2 * len(gcn_dims) + 2 * len(dec_hidden_dims) + 2)
    ki = iter(range(len(keys)))

    gcn = []
    for (din, dout) in gcn_dims:
        w = _glorot(keys[next(ki)], (din, dout))
        b = 0.01 * jax.random.normal(keys[next(ki)], (1, dout), jnp.float32)
        gcn.append((w, b))

    dec_hidden = []
    for (din, dout) in dec_hidden_dims:
        w = _glorot(keys[next(ki)], (din, dout))
        b = 0.01 * jax.random.normal(keys[next(ki)], (1, dout), jnp.float32)
        gamma = jnp.ones((1, dout), jnp.float32)       # BatchNorm1d defaults
        beta = jnp.zeros((1, dout), jnp.float32)
        mean = jnp.zeros((1, dout), jnp.float32)
        var = jnp.ones((1, dout), jnp.float32)
        dec_hidden.append(_fold_bn(w, b, gamma, beta, mean, var))

    w_out = _glorot(keys[next(ki)], (f, 1))
    b_out = 0.01 * jax.random.normal(keys[next(ki)], (1, 1), jnp.float32)

    return {"gcn": gcn, "dec_hidden": dec_hidden, "dec_out": (w_out, b_out)}


# ---------------------------------- main ------------------------------------ #

if __name__ == "__main__":
    key = jax.random.PRNGKey(0)
    batch, num_nodes, input_fea, num_edges = 4, 16, 8, 32

    k_p, k_x, k_e = jax.random.split(key, 3)
    x1 = jax.random.normal(k_x, (batch, num_nodes, input_fea), jnp.float32)

    e_keys = jax.random.split(k_e, 2 * batch)
    a_list = []
    for g in range(batch):
        src = jax.random.randint(e_keys[2 * g], (num_edges,), 0, num_nodes)
        dst = jax.random.randint(e_keys[2 * g + 1], (num_edges,), 0, num_nodes)
        edge_index = jnp.stack([src, dst])            # [2, E], like PyG
        a_list.append(build_norm_adj(edge_index, num_nodes))
    a_hat = jnp.stack(a_list)                         # (B, N, N)

    params = init_params(k_p, input_fea)

    y = gnn_forward(params, x1, a_hat)
    jax.block_until_ready(y)
    assert y.shape == (batch, 1)
    print("KERNEL_OK")
</pallas_src>

<mosaic_0001>
module attributes {stable_mosaic.version = 11 : i64} {
  func.func @_gnn_fused_kernel(%arg0: i32, %arg1: memref<1x16x16xbf16, #tpu.memory_space<vmem>>, %arg2: memref<1x16x128xbf16, #tpu.memory_space<vmem>>, %arg3: memref<1024x128xbf16, #tpu.memory_space<vmem>>, %arg4: memref<8x128xf32, #tpu.memory_space<vmem>>, %arg5: memref<1x8x128xf32, #tpu.memory_space<vmem>>) attributes {dimension_semantics = [#tpu.dimension_semantics<parallel>], iteration_bounds = array<i64: 4>, scalar_prefetch = 0 : i64, scratch_operands = 0 : i64, tpu.core_type = #tpu.core_type<tc>, window_params = [{transform_indices = @transform_0, window_bounds = array<i64: 1, 16, 16>}, {transform_indices = @transform_1, window_bounds = array<i64: 1, 16, 128>}, {pipeline_mode = #tpu.pipeline_mode<synchronous>, transform_indices = @transform_2, window_bounds = array<i64: 1024, 128>}, {pipeline_mode = #tpu.pipeline_mode<synchronous>, transform_indices = @transform_3, window_bounds = array<i64: 8, 128>}, {transform_indices = @transform_4, window_bounds = array<i64: 1, 8, 128>}]} {
    %c0 = arith.constant 0 : index
    %c0_0 = arith.constant 0 : index
    %c0_1 = arith.constant 0 : index
    %0 = vector.load %arg1[%c0, %c0_0, %c0_1] : memref<1x16x16xbf16, #tpu.memory_space<vmem>>, vector<1x16x16xbf16>
    %1 = vector.shape_cast %0 : vector<1x16x16xbf16> to vector<16x16xbf16>
    %c0_2 = arith.constant 0 : index
    %c0_3 = arith.constant 0 : index
    %c0_4 = arith.constant 0 : index
    %2 = vector.load %arg2[%c0_2, %c0_3, %c0_4] : memref<1x16x128xbf16, #tpu.memory_space<vmem>>, vector<1x16x128xbf16>
    %3 = vector.shape_cast %2 : vector<1x16x128xbf16> to vector<16x128xbf16>
    %c0_5 = arith.constant 0 : index
    %c0_6 = arith.constant 0 : index
    %4 = vector.load %arg3[%c0_5, %c0_6] : memref<1024x128xbf16, #tpu.memory_space<vmem>>, vector<128x128xbf16>
    %c0_7 = arith.constant 0 : index
    %c0_8 = arith.constant 0 : index
    %5 = vector.load %arg4[%c0_7, %c0_8] : memref<8x128xf32, #tpu.memory_space<vmem>>, vector<1x128xf32>
    %cst = arith.constant dense<0.000000e+00> : vector<16x128xf32>
    %6 = tpu.matmul %1, %3, %cst {dimension_numbers = #tpu.dot_dimension_numbers<[1], [0], [0], [1], [0, 0, 1, 1], [], []>} : vector<16x16xbf16>, vector<16x128xbf16>, vector<16x128xf32> -> vector<16x128xf32>
    %7 = arith.truncf %6 : vector<16x128xf32> to vector<16x128xbf16>
    %cst_9 = arith.constant dense<0.000000e+00> : vector<16x128xf32>
    %8 = tpu.matmul %7, %4, %cst_9 {dimension_numbers = #tpu.dot_dimension_numbers<[1], [0], [0], [1], [0, 0, 1, 1], [], []>} : vector<16x128xbf16>, vector<128x128xbf16>, vector<16x128xf32> -> vector<16x128xf32>
    %9 = vector.broadcast %5 : vector<1x128xf32> to vector<16x128xf32>
    %10 = arith.addf %8, %9 : vector<16x128xf32>
    %cst_10 = arith.constant 0.000000e+00 : f32
    %11 = vector.broadcast %cst_10 : f32 to vector<16x128xf32>
    %12 = arith.maximumf %10, %11 : vector<16x128xf32>
    %13 = arith.truncf %12 : vector<16x128xf32> to vector<16x128xbf16>
    %c128 = arith.constant 128 : index
    %c0_11 = arith.constant 0 : index
    %14 = vector.load %arg3[%c128, %c0_11] : memref<1024x128xbf16, #tpu.memory_space<vmem>>, vector<128x128xbf16>
    %c1 = arith.constant 1 : index
    %c0_12 = arith.constant 0 : index
    %15 = vector.load %arg4[%c1, %c0_12] : memref<8x128xf32, #tpu.memory_space<vmem>>, vector<1x128xf32>
    %cst_13 = arith.constant dense<0.000000e+00> : vector<16x128xf32>
    %16 = tpu.matmul %1, %13, %cst_13 {dimension_numbers = #tpu.dot_dimension_numbers<[1], [0], [0], [1], [0, 0, 1, 1], [], []>} : vector<16x16xbf16>, vector<16x128xbf16>, vector<16x128xf32> -> vector<16x128xf32>
    %17 = arith.truncf %16 : vector<16x128xf32> to vector<16x128xbf16>
    %cst_14 = arith.constant dense<0.000000e+00> : vector<16x128xf32>
    %18 = tpu.matmul %17, %14, %cst_14 {dimension_numbers = #tpu.dot_dimension_numbers<[1], [0], [0], [1], [0, 0, 1, 1], [], []>} : vector<16x128xbf16>, vector<128x128xbf16>, vector<16x128xf32> -> vector<16x128xf32>
    %19 = vector.broadcast %15 : vector<1x128xf32> to vector<16x128xf32>
    %20 = arith.addf %18, %19 : vector<16x128xf32>
    %cst_15 = arith.constant 0.000000e+00 : f32
    %21 = vector.broadcast %cst_15 : f32 to vector<16x128xf32>
    %22 = arith.maximumf %20, %21 : vector<16x128xf32>
    %23 = arith.truncf %22 : vector<16x128xf32> to vector<16x128xbf16>
    %c256 = arith.constant 256 : index
    %c0_16 = arith.constant 0 : index
    %24 = vector.load %arg3[%c256, %c0_16] : memref<1024x128xbf16, #tpu.memory_space<vmem>>, vector<128x128xbf16>
    %c2 = arith.constant 2 : index
    %c0_17 = arith.constant 0 : index
    %25 = vector.load %arg4[%c2, %c0_17] : memref<8x128xf32, #tpu.memory_space<vmem>>, vector<1x128xf32>
    %cst_18 = arith.constant dense<0.000000e+00> : vector<16x128xf32>
    %26 = tpu.matmul %1, %23, %cst_18 {dimension_numbers = #tpu.dot_dimension_numbers<[1], [0], [0], [1], [0, 0, 1, 1], [], []>} : vector<16x16xbf16>, vector<16x128xbf16>, vector<16x128xf32> -> vector<16x128xf32>
    %27 = arith.truncf %26 : vector<16x128xf32> to vector<16x128xbf16>
    %cst_19 = arith.constant dense<0.000000e+00> : vector<16x128xf32>
    %28 = tpu.matmul %27, %24, %cst_19 {dimension_numbers = #tpu.dot_dimension_numbers<[1], [0], [0], [1], [0, 0, 1, 1], [], []>} : vector<16x128xbf16>, vector<128x128xbf16>, vector<16x128xf32> -> vector<16x128xf32>
    %29 = vector.broadcast %25 : vector<1x128xf32> to vector<16x128xf32>
    %30 = arith.addf %28, %29 : vector<16x128xf32>
    %cst_20 = arith.constant 0.000000e+00 : f32
    %31 = vector.broadcast %cst_20 : f32 to vector<16x128xf32>
    %32 = arith.maximumf %30, %31 : vector<16x128xf32>
    %33 = arith.truncf %32 : vector<16x128xf32> to vector<16x128xbf16>
    %c384 = arith.constant 384 : index
    %c0_21 = arith.constant 0 : index
    %34 = vector.load %arg3[%c384, %c0_21] : memref<1024x128xbf16, #tpu.memory_space<vmem>>, vector<128x128xbf16>
    %c3 = arith.constant 3 : index
    %c0_22 = arith.constant 0 : index
    %35 = vector.load %arg4[%c3, %c0_22] : memref<8x128xf32, #tpu.memory_space<vmem>>, vector<1x128xf32>
    %cst_23 = arith.constant dense<0.000000e+00> : vector<16x128xf32>
    %36 = tpu.matmul %1, %33, %cst_23 {dimension_numbers = #tpu.dot_dimension_numbers<[1], [0], [0], [1], [0, 0, 1, 1], [], []>} : vector<16x16xbf16>, vector<16x128xbf16>, vector<16x128xf32> -> vector<16x128xf32>
    %37 = arith.truncf %36 : vector<16x128xf32> to vector<16x128xbf16>
    %cst_24 = arith.constant dense<0.000000e+00> : vector<16x128xf32>
    %38 = tpu.matmul %37, %34, %cst_24 {dimension_numbers = #tpu.dot_dimension_numbers<[1], [0], [0], [1], [0, 0, 1, 1], [], []>} : vector<16x128xbf16>, vector<128x128xbf16>, vector<16x128xf32> -> vector<16x128xf32>
    %39 = vector.broadcast %35 : vector<1x128xf32> to vector<16x128xf32>
    %40 = arith.addf %38, %39 : vector<16x128xf32>
    %cst_25 = arith.constant 0.000000e+00 : f32
    %41 = vector.broadcast %cst_25 : f32 to vector<16x128xf32>
    %42 = arith.maximumf %40, %41 : vector<16x128xf32>
    %cst_26 = arith.constant dense<0xFF800000> : vector<128xf32>
    %43 = vector.multi_reduction <maximumf>, %42, %cst_26 [0] : vector<16x128xf32> to vector<128xf32>
    %44 = vector.shape_cast %43 : vector<128xf32> to vector<1x128xf32>
    %c512 = arith.constant 512 : index
    %c0_27 = arith.constant 0 : index
    %45 = vector.load %arg3[%c512, %c0_27] : memref<1024x128xbf16, #tpu.memory_space<vmem>>, vector<128x128xbf16>
    %c4 = arith.constant 4 : index
    %c0_28 = arith.constant 0 : index
    %46 = vector.load %arg4[%c4, %c0_28] : memref<8x128xf32, #tpu.memory_space<vmem>>, vector<1x128xf32>
    %47 = arith.truncf %44 : vector<1x128xf32> to vector<1x128xbf16>
    %cst_29 = arith.constant dense<0.000000e+00> : vector<1x128xf32>
    %48 = tpu.matmul %47, %45, %cst_29 {dimension_numbers = #tpu.dot_dimension_numbers<[1], [0], [0], [1], [0, 0, 1, 1], [], []>} : vector<1x128xbf16>, vector<128x128xbf16>, vector<1x128xf32> -> vector<1x128xf32>
    %49 = arith.addf %48, %46 : vector<1x128xf32>
    %cst_30 = arith.constant 0.000000e+00 : f32
    %50 = vector.broadcast %cst_30 : f32 to vector<1x128xf32>
    %51 = arith.maximumf %49, %50 : vector<1x128xf32>
    %c640 = arith.constant 640 : index
    %c0_31 = arith.constant 0 : index
    %52 = vector.load %arg3[%c640, %c0_31] : memref<1024x128xbf16, #tpu.memory_space<vmem>>, vector<128x128xbf16>
    %c5 = arith.constant 5 : index
    %c0_32 = arith.constant 0 : index
    %53 = vector.load %arg4[%c5, %c0_32] : memref<8x128xf32, #tpu.memory_space<vmem>>, vector<1x128xf32>
    %54 = arith.truncf %51 : vector<1x128xf32> to vector<1x128xbf16>
    %cst_33 = arith.constant dense<0.000000e+00> : vector<1x128xf32>
    %55 = tpu.matmul %54, %52, %cst_33 {dimension_numbers = #tpu.dot_dimension_numbers<[1], [0], [0], [1], [0, 0, 1, 1], [], []>} : vector<1x128xbf16>, vector<128x128xbf16>, vector<1x128xf32> -> vector<1x128xf32>
    %56 = arith.addf %55, %53 : vector<1x128xf32>
    %cst_34 = arith.constant 0.000000e+00 : f32
    %57 = vector.broadcast %cst_34 : f32 to vector<1x128xf32>
    %58 = arith.maximumf %56, %57 : vector<1x128xf32>
    %c768 = arith.constant 768 : index
    %c0_35 = arith.constant 0 : index
    %59 = vector.load %arg3[%c768, %c0_35] : memref<1024x128xbf16, #tpu.memory_space<vmem>>, vector<128x128xbf16>
    %c6 = arith.constant 6 : index
    %c0_36 = arith.constant 0 : index
    %60 = vector.load %arg4[%c6, %c0_36] : memref<8x128xf32, #tpu.memory_space<vmem>>, vector<1x128xf32>
    %61 = arith.truncf %58 : vector<1x128xf32> to vector<1x128xbf16>
    %cst_37 = arith.constant dense<0.000000e+00> : vector<1x128xf32>
    %62 = tpu.matmul %61, %59, %cst_37 {dimension_numbers = #tpu.dot_dimension_numbers<[1], [0], [0], [1], [0, 0, 1, 1], [], []>} : vector<1x128xbf16>, vector<128x128xbf16>, vector<1x128xf32> -> vector<1x128xf32>
    %63 = arith.addf %62, %60 : vector<1x128xf32>
    %cst_38 = arith.constant 0.000000e+00 : f32
    %64 = vector.broadcast %cst_38 : f32 to vector<1x128xf32>
    %65 = arith.maximumf %63, %64 : vector<1x128xf32>
    %c896 = arith.constant 896 : index
    %c0_39 = arith.constant 0 : index
    %66 = vector.load %arg3[%c896, %c0_39] : memref<1024x128xbf16, #tpu.memory_space<vmem>>, vector<128x128xbf16>
    %c7 = arith.constant 7 : index
    %c0_40 = arith.constant 0 : index
    %67 = vector.load %arg4[%c7, %c0_40] : memref<8x128xf32, #tpu.memory_space<vmem>>, vector<1x128xf32>
    %68 = arith.truncf %65 : vector<1x128xf32> to vector<1x128xbf16>
    %cst_41 = arith.constant dense<0.000000e+00> : vector<1x128xf32>
    %69 = tpu.matmul %68, %66, %cst_41 {dimension_numbers = #tpu.dot_dimension_numbers<[1], [0], [0], [1], [0, 0, 1, 1], [], []>} : vector<1x128xbf16>, vector<128x128xbf16>, vector<1x128xf32> -> vector<1x128xf32>
    %70 = arith.addf %69, %67 : vector<1x128xf32>
    %71 = vector.shape_cast %70 : vector<1x128xf32> to vector<1x128xf32>
    %72 = vector.broadcast %71 : vector<1x128xf32> to vector<8x128xf32>
    %c0_42 = arith.constant 0 : index
    %c0_43 = arith.constant 0 : index
    %c0_44 = arith.constant 0 : index
    %73 = vector.load %arg5[%c0_42, %c0_43, %c0_44] : memref<1x8x128xf32, #tpu.memory_space<vmem>>, vector<1x8x128xf32>
    %74 = vector.shape_cast %73 : vector<1x8x128xf32> to vector<8x128xf32>
    %75 = vector.shape_cast %72 : vector<8x128xf32> to vector<1x8x128xf32>
    tpu.vector_store %arg5[%c0_42, %c0_43, %c0_44], %75 {strides = array<i32>} : memref<1x8x128xf32, #tpu.memory_space<vmem>>, vector<1x8x128xf32>,
    return
  }
  func.func @transform_0(%arg0: i32) -> (i32, i32, i32) {
    %c0_i32 = arith.constant 0 : i32
    %c0_i32_0 = arith.constant 0 : i32
    %c0_i32_1 = arith.constant 0 : i32
    return %arg0, %c0_i32, %c0_i32_0 : i32, i32, i32
  }
  func.func @transform_1(%arg0: i32) -> (i32, i32, i32) {
    %c0_i32 = arith.constant 0 : i32
    %c0_i32_0 = arith.constant 0 : i32
    %c0_i32_1 = arith.constant 0 : i32
    return %arg0, %c0_i32, %c0_i32_0 : i32, i32, i32
  }
  func.func @transform_2(%arg0: i32) -> (i32, i32) {
    %c0_i32 = arith.constant 0 : i32
    %c0_i32_0 = arith.constant 0 : i32
    %c0_i32_1 = arith.constant 0 : i32
    return %c0_i32, %c0_i32_0 : i32, i32
  }
  func.func @transform_3(%arg0: i32) -> (i32, i32) {
    %c0_i32 = arith.constant 0 : i32
    %c0_i32_0 = arith.constant 0 : i32
    %c0_i32_1 = arith.constant 0 : i32
    return %c0_i32, %c0_i32_0 : i32, i32
  }
  func.func @transform_4(%arg0: i32) -> (i32, i32, i32) {
    %c0_i32 = arith.constant 0 : i32
    %c0_i32_0 = arith.constant 0 : i32
    %c0_i32_1 = arith.constant 0 : i32
    return %arg0, %c0_i32, %c0_i32_0 : i32, i32, i32
  }
}

</mosaic_0001>

<llo_original>
// kernel: tpu_custom_call.1
$region0: #{tpu_custom_call.1}
  #allocation0 [shape = 'u32[]', space=smem, size = 0x4, offset = 0x4, fixed_abs, tag = 'smem constant byte address 0x4 - core index']
  #allocation1 [shape = 'u32[144,128]{1,0:T(1,128)}', space=vmem, size = 0x12000, scoped, tag = 'internal scratch']
  %s0 = inlined_call_operand.hbm [shape: bf16[4,16,16], index: 0, kind: input, shape index: {}]
  %s1 = inlined_call_operand.hbm [shape: bf16[4,16,128], index: 1, kind: input, shape index: {}]
  %s2 = inlined_call_operand.hbm [shape: bf16[1024,128], index: 2, kind: input, shape index: {}]
  %s3 = inlined_call_operand.hbm [shape: f32[8,128], index: 3, kind: input, shape index: {}]
  %s4 = inlined_call_operand.hbm [shape: f32[4,8,128], index: 4, kind: output, shape index: {}]
  %s5 = sld [smem:[#allocation0]]
  $region65: #{tpu_custom_call.1} parent=0
    _
  %s7 = ssub.s32 1, %s5
  %s8 = scalar_select 0, %s7, %s5
  $region1: #{tpu_custom_call.1} parent=0
    #allocation2 [shape = 'u8[8192]{0}', space=vmem, size = 0x2000, scoped, tag = 'input window, operand 0']
    #allocation3 [shape = 's32[2]{0}', space=sflag, size = 0x8, scoped, tag = 'scoped memory for tpu_custom_call.1']
    #allocation4 [shape = 's32[2]{0}', space=sflag, size = 0x8, scoped, tag = 'scoped memory for tpu_custom_call.1']
    #allocation5 [shape = 'u8[8192]{0}', space=vmem, size = 0x2000, scoped, tag = 'input window, operand 1']
    #allocation6 [shape = 's32[2]{0}', space=sflag, size = 0x8, scoped, tag = 'scoped memory for tpu_custom_call.1']
    #allocation7 [shape = 'u8[262144]{0}', space=vmem, size = 0x40000, scoped, tag = 'input window, operand 2, single buffered']
    #allocation8 [shape = 'u8[4096]{0}', space=vmem, size = 0x1000, scoped, tag = 'input window, operand 3, single buffered']
    #allocation9 [shape = 's32[1]{0}', space=sflag, size = 0x4, scoped, tag = 'scoped memory for tpu_custom_call.1']
    #allocation10 [shape = 'u8[8192]{0}', space=vmem, size = 0x2000, scoped, tag = 'output window, operand 0']
    %9 = vsyncpa [#allocation3], 0
    %s10 = scalar_lea.sflag [#allocation3], 1
    %11 = vsyncpa %s10, 0
    %12 = vsyncpa [#allocation6], 0
    %s13 = scalar_lea.sflag [#allocation6], 1
    %14 = vsyncpa %s13, 0
    %15 = vsyncpa [#allocation9], 0
    %16 = vsyncpa [#allocation4], 0
    %s17 = scalar_lea.sflag [#allocation4], 1
    %18 = vsyncpa %s17, 0
    loop: start=0, step=1, limit=6
    $region2: #{tpu_custom_call.1} parent=1 // loop_pre_header
      _
    $region3: #{tpu_custom_call.1} parent=1 // loop_header
      %s20 = sphi 0, %s24
      %p21 = scmp.ge.s32.totalorder %s20, 6
      %s30 = sphi 0, %s32
      %s33 = sphi 0, %s30
      %s34 = sphi 0, %s33
      %s50 = sphi 0, %s34
      %s56 = sphi 0, %s58
      %s59 = sphi 0, %s56
      %s60 = sphi 0, %s59
      %s76 = sphi 0, %s60
      %s80 = sphi 0, %s80
      %s82 = sphi 0, %s80
      %s83 = sphi 0, %s82
      %s97 = sphi 0, %s83
      %s101 = sphi 0, %s101
      %s103 = sphi 0, %s101
      %s104 = sphi 0, %s103
      %s118 = sphi 0, %s104
      %s124 = sphi 0, %s126
      %s127 = sphi 0, %s124
      %s128 = sphi 0, %s127
      %s144 = sphi 0, %s128
    $region4: #{tpu_custom_call.1} parent=1 // loop_header_branch
      %23 = sbr.rel (%p21) target = $region8
    $region5: #{tpu_custom_call.1} parent=1 // loop_body
      %s25 = ssub.s32 %s20, 1
      %s26 = ssub.s32 %s20, 2
      %s27 = sadd.s32 %s20, 1
      %s28 = ssub.s32 %s20, %s27
      %p29 = scmp.eq.s32.totalorder %s28, 0
      %s31 = sadd.s32 %s30, 1
      %s32 = scalar_select %p29, %s30, %s31
      %p35 = pneg %p29
      %p36 = scmp.eq.s32.totalorder %s20, 3
      %p37 = por %p35, %p36
      %p38 = scmp.ne.s32.totalorder %s30, %s33
      %p39 = scmp.eq.s32.totalorder %s20, 0
      %p40 = por %p38, %p39
      %p41 = scmp.ne.s32.totalorder %s30, %s33
      %p42 = scmp.eq.s32.totalorder %s25, 3
      %p43 = por %p41, %p42
      %p44 = scmp.ne.s32.totalorder %s33, %s34
      %p45 = scmp.eq.s32.totalorder %s25, 0
      %p46 = por %p44, %p45
      %p47 = scmp.ne.s32.totalorder %s33, %s34
      %p48 = scmp.eq.s32.totalorder %s26, 3
      %p49 = por %p47, %p48
      %p51 = scmp.ne.s32.totalorder %s34, %s50
      %p52 = scmp.eq.s32.totalorder %s26, 0
      %p53 = por %p51, %p52
      %s54 = ssub.s32 %s20, %s27
      %p55 = scmp.eq.s32.totalorder %s54, 0
      %s57 = sadd.s32 %s56, 1
      %s58 = scalar_select %p55, %s56, %s57
      %p61 = pneg %p55
      %p62 = scmp.eq.s32.totalorder %s20, 3
      %p63 = por %p61, %p62
      %p64 = scmp.ne.s32.totalorder %s56, %s59
      %p65 = scmp.eq.s32.totalorder %s20, 0
      %p66 = por %p64, %p65
      %p67 = scmp.ne.s32.totalorder %s56, %s59
      %p68 = scmp.eq.s32.totalorder %s25, 3
      %p69 = por %p67, %p68
      %p70 = scmp.ne.s32.totalorder %s59, %s60
      %p71 = scmp.eq.s32.totalorder %s25, 0
      %p72 = por %p70, %p71
      %p73 = scmp.ne.s32.totalorder %s59, %s60
      %p74 = scmp.eq.s32.totalorder %s26, 3
      %p75 = por %p73, %p74
      %p77 = scmp.ne.s32.totalorder %s60, %s76
      %p78 = scmp.eq.s32.totalorder %s26, 0
      %p79 = por %p77, %p78
      %s81 = sadd.s32 %s80, 1
      %p84 = scmp.eq.s32.totalorder %s20, 3
      %p85 = scmp.ne.s32.totalorder %s80, %s82
      %p86 = scmp.eq.s32.totalorder %s20, 0
      %p87 = por %p85, %p86
      %p88 = scmp.ne.s32.totalorder %s80, %s82
      %p89 = scmp.eq.s32.totalorder %s25, 3
      %p90 = por %p88, %p89
      %p91 = scmp.ne.s32.totalorder %s82, %s83
      %p92 = scmp.eq.s32.totalorder %s25, 0
      %p93 = por %p91, %p92
      %p94 = scmp.ne.s32.totalorder %s82, %s83
      %p95 = scmp.eq.s32.totalorder %s26, 3
      %p96 = por %p94, %p95
      %p98 = scmp.ne.s32.totalorder %s83, %s97
      %p99 = scmp.eq.s32.totalorder %s26, 0
      %p100 = por %p98, %p99
      %s102 = sadd.s32 %s101, 1
      %p105 = scmp.eq.s32.totalorder %s20, 3
      %p106 = scmp.ne.s32.totalorder %s101, %s103
      %p107 = scmp.eq.s32.totalorder %s20, 0
      %p108 = por %p106, %p107
      %p109 = scmp.ne.s32.totalorder %s101, %s103
      %p110 = scmp.eq.s32.totalorder %s25, 3
      %p111 = por %p109, %p110
      %p112 = scmp.ne.s32.totalorder %s103, %s104
      %p113 = scmp.eq.s32.totalorder %s25, 0
      %p114 = por %p112, %p113
      %p115 = scmp.ne.s32.totalorder %s103, %s104
      %p116 = scmp.eq.s32.totalorder %s26, 3
      %p117 = por %p115, %p116
      %p119 = scmp.ne.s32.totalorder %s104, %s118
      %p120 = scmp.eq.s32.totalorder %s26, 0
      %p121 = por %p119, %p120
      %s122 = ssub.s32 %s20, %s27
      %p123 = scmp.eq.s32.totalorder %s122, 0
      %s125 = sadd.s32 %s124, 1
      %s126 = scalar_select %p123, %s124, %s125
      %p129 = pneg %p123
      %p130 = scmp.eq.s32.totalorder %s20, 3
      %p131 = por %p129, %p130
      %p132 = scmp.ne.s32.totalorder %s124, %s127
      %p133 = scmp.eq.s32.totalorder %s20, 0
      %p134 = por %p132, %p133
      %p135 = scmp.ne.s32.totalorder %s124, %s127
      %p136 = scmp.eq.s32.totalorder %s25, 3
      %p137 = por %p135, %p136
      %p138 = scmp.ne.s32.totalorder %s127, %s128
      %p139 = scmp.eq.s32.totalorder %s25, 0
      %p140 = por %p138, %p139
      %p141 = scmp.ne.s32.totalorder %s127, %s128
      %p142 = scmp.eq.s32.totalorder %s26, 3
      %p143 = por %p141, %p142
      %p145 = scmp.ne.s32.totalorder %s128, %s144
      %p146 = scmp.eq.s32.totalorder %s26, 0
      %p147 = por %p145, %p146
      %p148 = scmp.le.s32.totalorder 1, %s20
      %p149 = scmp.lt.s32.totalorder %s20, 5
      %p150 = pnand %p148, %p149
      %p151 = pneg %p150
      // Predicated region
      $region9: #{tpu_custom_call.1} parent=5 // pred_check
        _
      $region10: #{tpu_custom_call.1} parent=5 // pred_check_branch
        %153 = sbr.rel (%p150) target = $region12
      $region11: #{tpu_custom_call.1} parent=5 // pred_region
        %s154 = ssub.s32 %s20, 1
        // Predicated region
        $region13: #{tpu_custom_call.1} parent=11 // pred_check
          %p155 = pneg %p93
        $region14: #{tpu_custom_call.1} parent=11 // pred_check_branch
          %157 = sbr.rel (%p155) target = $region16
        $region15: #{tpu_custom_call.1} parent=11 // pred_region
          %s159 = ssub.s32 8192, 8192
          %160 = vsyncadd [#allocation6], %s159
          %s161 = sshll.u32 [#allocation7], 4
          %s162 = int_to_ptr.vmem [resolvable:$true] %s161
          %167 = dma.hbm_to_vmem [thread:$0]  %s2, 8192, %s162, [#allocation6], 64, 64, 4
        $region16: #{tpu_custom_call.1} parent=11 // pred_fallthru
          _
        // Predicated region
        $region17: #{tpu_custom_call.1} parent=11 // pred_check
          %p168 = pneg %p114
        $region18: #{tpu_custom_call.1} parent=11 // pred_check_branch
          %170 = sbr.rel (%p168) target = $region20
        $region19: #{tpu_custom_call.1} parent=11 // pred_region
          %s172 = ssub.s32 128, 128
          %173 = vsyncadd [#allocation9], %s172
          %s175 = sshll.u32 [#allocation8], 4
          %s176 = int_to_ptr.vmem [resolvable:$true] %s175
          %178 = dma.hbm_to_vmem [thread:$0]  %s3, 128, %s176, [#allocation9]
        $region20: #{tpu_custom_call.1} parent=11 // pred_fallthru
          _
      $region12: #{tpu_custom_call.1} parent=5 // pred_fallthru
        _
      %p179 = scmp.lt.s32.totalorder %s20, 4
      // Predicated region
      $region21: #{tpu_custom_call.1} parent=5 // pred_check
        %p180 = pneg %p179
      $region22: #{tpu_custom_call.1} parent=5 // pred_check_branch
        %182 = sbr.rel (%p180) target = $region24
      $region23: #{tpu_custom_call.1} parent=5 // pred_region
        // Predicated region
        $region25: #{tpu_custom_call.1} parent=23 // pred_check
          %p183 = pneg %p40
        $region26: #{tpu_custom_call.1} parent=23 // pred_check_branch
          %185 = sbr.rel (%p183) target = $region28
        $region27: #{tpu_custom_call.1} parent=23 // pred_region
          %s186 = sand.u32 %s30, 1
          %s187 = scalar_lea.sflag [#allocation3], %s186
          %s188 = sand.u32 %s30, 1
          %s189 = smul.addr %s188, 8
          %s190 = scalar_lea.vmem [#allocation2], %s189
          %s192 = ssub.s32 128, 128
          %193 = vsyncadd %s187, %s192
          %s194 = smul.addr %s20, 2
          %s195 = smul.addr %s194, 64
          %s196 = scalar_lea.hbm %s0, %s195
          %s197 = sshll.u32 %s190, 4
          %s198 = int_to_ptr.vmem [resolvable:$true] %s197
          %203 = dma.hbm_to_vmem [thread:$0]  %s196, 128, %s198, %s187, 64, 64, 4
        $region28: #{tpu_custom_call.1} parent=23 // pred_fallthru
          _
        // Predicated region
        $region29: #{tpu_custom_call.1} parent=23 // pred_check
          %p204 = pneg %p66
        $region30: #{tpu_custom_call.1} parent=23 // pred_check_branch
          %206 = sbr.rel (%p204) target = $region32
        $region31: #{tpu_custom_call.1} parent=23 // pred_region
          %s207 = sand.u32 %s20, 1
          %s208 = scalar_lea.sflag [#allocation6], %s207
          %s209 = sand.u32 %s56, 1
          %s210 = smul.addr %s209, 8
          %s211 = scalar_lea.vmem [#allocation5], %s210
          %s213 = ssub.s32 128, 128
          %214 = vsyncadd %s208, %s213
          %s215 = smul.addr %s20, 2
          %s216 = smul.addr %s215, 64
          %s217 = scalar_lea.hbm %s1, %s216
          %s218 = sshll.u32 %s211, 4
          %s219 = int_to_ptr.vmem [resolvable:$true] %s218
          %224 = dma.hbm_to_vmem [thread:$0]  %s217, 128, %s219, %s208, 64, 64, 4
        $region32: #{tpu_custom_call.1} parent=23 // pred_fallthru
          _
      $region24: #{tpu_custom_call.1} parent=5 // pred_fallthru
        _
      %p225 = scmp.le.s32.totalorder 1, %s20
      %p226 = scmp.lt.s32.totalorder %s20, 5
      %p227 = pnand %p225, %p226
      %p228 = pneg %p227
      // Predicated region
      $region33: #{tpu_custom_call.1} parent=5 // pred_check
        _
      $region34: #{tpu_custom_call.1} parent=5 // pred_check_branch
        %230 = sbr.rel (%p227) target = $region36
      $region35: #{tpu_custom_call.1} parent=5 // pred_region
        %s231 = ssub.s32 %s20, 1
        %s232 = sand.u32 %s33, 1
        %s233 = scalar_lea.sflag [#allocation3], %s232
        %s234 = sand.u32 %s33, 1
        %s235 = smul.addr %s234, 8
        %s236 = scalar_lea.vmem [#allocation2], %s235
        // Predicated region
        $region37: #{tpu_custom_call.1} parent=35 // pred_check
          %p237 = pneg %p46
        $region38: #{tpu_custom_call.1} parent=35 // pred_check_branch
          %239 = sbr.rel (%p237) target = $region40
        $region39: #{tpu_custom_call.1} parent=35 // pred_region
          %240 = dma.done %s233, 128
        $region40: #{tpu_custom_call.1} parent=35 // pred_fallthru
          _
        %s241 = sand.u32 %s25, 1
        %s242 = scalar_lea.sflag [#allocation6], %s241
        %s243 = sand.u32 %s59, 1
        %s244 = smul.addr %s243, 8
        %s245 = scalar_lea.vmem [#allocation5], %s244
        // Predicated region
        $region41: #{tpu_custom_call.1} parent=35 // pred_check
          %p246 = pneg %p72
        $region42: #{tpu_custom_call.1} parent=35 // pred_check_branch
          %248 = sbr.rel (%p246) target = $region44
        $region43: #{tpu_custom_call.1} parent=35 // pred_region
          %249 = dma.done %s242, 128
        $region44: #{tpu_custom_call.1} parent=35 // pred_fallthru
          _
        // Predicated region
        $region45: #{tpu_custom_call.1} parent=35 // pred_check
          %p250 = pneg %p93
        $region46: #{tpu_custom_call.1} parent=35 // pred_check_branch
          %252 = sbr.rel (%p250) target = $region48
        $region47: #{tpu_custom_call.1} parent=35 // pred_region
          %253 = dma.done [#allocation6], 8192
        $region48: #{tpu_custom_call.1} parent=35 // pred_fallthru
          _
        // Predicated region
        $region49: #{tpu_custom_call.1} parent=35 // pred_check
          %p254 = pneg %p114
        $region50: #{tpu_custom_call.1} parent=35 // pred_check_branch
          %256 = sbr.rel (%p254) target = $region52
        $region51: #{tpu_custom_call.1} parent=35 // pred_region
          %257 = dma.done [#allocation9], 128
        $region52: #{tpu_custom_call.1} parent=35 // pred_fallthru
          _
        %s258 = sand.u32 %s33, 1
        %s259 = scalar_lea.sflag [#allocation3], %s258
        %s260 = sand.u32 %s33, 1
        %s261 = smul.addr %s260, 8
        %s262 = scalar_lea.vmem [#allocation2], %s261
        %p263 = pneg %p46
        %p264 = pneg %p43
        %s265 = sand.u32 %s25, 1
        %s266 = scalar_lea.sflag [#allocation6], %s265
        %s267 = sand.u32 %s59, 1
        %s268 = smul.addr %s267, 8
        %s269 = scalar_lea.vmem [#allocation5], %s268
        %p270 = pneg %p72
        %p271 = pneg %p69
        %p272 = pneg %p93
        %p273 = pneg %p90
        %p274 = pneg %p114
        %p275 = pneg %p111
        %p276 = pneg %p140
        %p277 = pneg %p137
        %s278 = sand.u32 %s127, 1
        %s279 = scalar_lea.sflag [#allocation4], %s278
        %s280 = sand.u32 %s127, 1
        %s281 = smul.addr %s280, 8
        %s282 = scalar_lea.vmem [#allocation10], %s281
        %v284 = vld [vmem:[%s236] sm:$0xf]
        %v285 = vld [vmem:[%s236 + $0x4] sm:$0xf]
        %v286 = vld [vmem:[%s245] sm:$0xf]
        %v287 = vld [vmem:[%s245 + $0x4] sm:$0xf]
        %v288 = vld [vmem:[#allocation7] sm:$0xf]
        %v289 = vld [vmem:[#allocation7 + $0x4] sm:$0xf]
        %v290 = vld [vmem:[#allocation7 + $0x8] sm:$0xf]
        %v291 = vld [vmem:[#allocation7 + $0xc] sm:$0xf]
        %v292 = vld [vmem:[#allocation7 + $0x10] sm:$0xf]
        %v293 = vld [vmem:[#allocation7 + $0x14] sm:$0xf]
        %v294 = vld [vmem:[#allocation7 + $0x18] sm:$0xf]
        %v295 = vld [vmem:[#allocation7 + $0x1c] sm:$0xf]
        %v296 = vld [vmem:[#allocation7 + $0x20] sm:$0xf]
        %v297 = vld [vmem:[#allocation7 + $0x24] sm:$0xf]
        %v298 = vld [vmem:[#allocation7 + $0x28] sm:$0xf]
        %v299 = vld [vmem:[#allocation7 + $0x2c] sm:$0xf]
        %v300 = vld [vmem:[#allocation7 + $0x30] sm:$0xf]
        %v301 = vld [vmem:[#allocation7 + $0x34] sm:$0xf]
        %v302 = vld [vmem:[#allocation7 + $0x38] sm:$0xf]
        %v303 = vld [vmem:[#allocation7 + $0x3c] sm:$0xf]
        %v304 = vld [vmem:[#allocation8] sm:$0x1]
        %v307 = vunpack.c.l.b16 %v284
        %v308 = vunpack.c.l.b16 %v285
        %v309 = vpack.c.b16 %v308, %v307
        %v312 = vunpack.c.l.b16 %v286
        %v313 = vunpack.c.l.b16 %v287
        %v314 = vpack.c.b16 %v313, %v312
        %vm316 = vcmask 130048
        %v318 = vsel %vm316, %v309, 0
        %320 = vmatprep.subr.bf16.mxu0 0
        %321 = vmatpush1.bf16.msra.mxu0 0
        %322 = vmatprep.subr.bf16.mxu0 0
        %323 = vmatpush1.bf16.msra.mxu0 0
        %324 = vmatprep.subr.bf16.mxu0 0
        %325 = vmatpush1.bf16.msra.mxu0 0
        %326 = vmatprep.subr.bf16.mxu0 0
        %327 = vmatpush1.bf16.msra.mxu0 0
        %328 = vmatprep.subr.bf16.mxu0 0
        %329 = vmatpush1.bf16.msra.mxu0 0
        %330 = vmatprep.subr.bf16.mxu0 0
        %331 = vmatpush1.bf16.msra.mxu0 0
        %332 = vmatprep.subr.bf16.mxu0 0
        %333 = vmatpush1.bf16.msra.mxu0 0
        %334 = vmatprep.subr.bf16.mxu0 0
        %335 = vmatpush1.bf16.msra.mxu0 %v314
        %336 = vmatprep.subr.bf16.mxu0 0
        %337 = vmatpush2.bf16.msra.mxu0 0
        %338 = vmatprep.subr.bf16.mxu0 0
        %339 = vmatpush2.bf16.msra.mxu0 0
        %340 = vmatprep.subr.bf16.mxu0 0
        %341 = vmatpush2.bf16.msra.mxu0 0
        %342 = vmatprep.subr.bf16.mxu0 0
        %343 = vmatpush2.bf16.msra.mxu0 0
        %344 = vmatprep.subr.bf16.mxu0 0
        %345 = vmatpush2.bf16.msra.mxu0 0
        %346 = vmatprep.subr.bf16.mxu0 0
        %347 = vmatpush2.bf16.msra.mxu0 0
        %348 = vmatprep.subr.bf16.mxu0 0
        %349 = vmatpush2.bf16.msra.mxu0 0
        %350 = vmatprep.subr.bf16.mxu0 0
        %351 = vmatpush2.bf16.msra.mxu0 0
        %352 = vmatprep.mubr.bf16.mxu0 0
        %353 = vmatmul.mubr.bf16.gmra.mxu0 %v318
        %v354 = vpop.f32.mrf.mxu0
        %v355 = vadd.f32 0.0, %v354
        %v356 = vpop.f32.mrf.mxu0
        %v357 = vpop.f32.mrf.mxu0
        %v358 = vadd.f32 0.0, %v357
        %v359 = vpop.f32.mrf.mxu0
        %360 = vdwg.mxu0
        %v361 = vpack.c.bf16 %v358, %v355
        %v362 = vlaneseq
        %v363 = vshrl.u32 %v362, 7
        %v364 = vsub.s32 0, %v363
        %v365 = vrot.slane %v304, %v364
        %v382 = vunpack.c.l.b16 %v288
        %v383 = vunpack.c.l.b16 %v289
        %v384 = vunpack.c.l.b16 %v290
        %v385 = vunpack.c.l.b16 %v291
        %v386 = vunpack.c.l.b16 %v292
        %v387 = vunpack.c.l.b16 %v293
        %v388 = vunpack.c.l.b16 %v294
        %v389 = vunpack.c.l.b16 %v295
        %v390 = vunpack.c.l.b16 %v296
        %v391 = vunpack.c.l.b16 %v297
        %v392 = vunpack.c.l.b16 %v298
        %v393 = vunpack.c.l.b16 %v299
        %v394 = vunpack.c.l.b16 %v300
        %v395 = vunpack.c.l.b16 %v301
        %v396 = vunpack.c.l.b16 %v302
        %v397 = vunpack.c.l.b16 %v303
        %v398 = vpack.c.b16 %v383, %v382
        %v399 = vpack.c.b16 %v385, %v384
        %v400 = vpack.c.b16 %v387, %v386
        %v401 = vpack.c.b16 %v389, %v388
        %v402 = vpack.c.b16 %v391, %v390
        %v403 = vpack.c.b16 %v393, %v392
        %v404 = vpack.c.b16 %v395, %v394
        %v405 = vpack.c.b16 %v397, %v396
        %414 = vmatprep.subr.bf16.mxu0 0
        %415 = vmatpush1.bf16.msra.mxu0 %v405
        %416 = vmatprep.subr.bf16.mxu0 0
        %417 = vmatpush1.bf16.msra.mxu0 %v404
        %418 = vmatprep.subr.bf16.mxu0 0
        %419 = vmatpush1.bf16.msra.mxu0 %v403
        %420 = vmatprep.subr.bf16.mxu0 0
        %421 = vmatpush1.bf16.msra.mxu0 %v402
        %422 = vmatprep.subr.bf16.mxu0 0
        %423 = vmatpush1.bf16.msra.mxu0 %v401
        %424 = vmatprep.subr.bf16.mxu0 0
        %425 = vmatpush1.bf16.msra.mxu0 %v400
        %426 = vmatprep.subr.bf16.mxu0 0
        %427 = vmatpush1.bf16.msra.mxu0 %v399
        %428 = vmatprep.subr.bf16.mxu0 0
        %429 = vmatpush1.bf16.msra.mxu0 %v398
        %430 = vmatprep.subr.bf16.mxu0 0
        %431 = vmatpush2.bf16.msra.mxu0 0
        %432 = vmatprep.subr.bf16.mxu0 0
        %433 = vmatpush2.bf16.msra.mxu0 0
        %434 = vmatprep.subr.bf16.mxu0 0
        %435 = vmatpush2.bf16.msra.mxu0 0
        %436 = vmatprep.subr.bf16.mxu0 0
        %437 = vmatpush2.bf16.msra.mxu0 0
        %438 = vmatprep.subr.bf16.mxu0 0
        %439 = vmatpush2.bf16.msra.mxu0 0
        %440 = vmatprep.subr.bf16.mxu0 0
        %441 = vmatpush2.bf16.msra.mxu0 0
        %442 = vmatprep.subr.bf16.mxu0 0
        %443 = vmatpush2.bf16.msra.mxu0 0
        %444 = vmatprep.subr.bf16.mxu0 0
        %445 = vmatpush2.bf16.msra.mxu0 0
        %446 = vmatprep.mubr.bf16.mxu0 0
        %447 = vmatmul.mubr.bf16.gmra.mxu0 %v361
        %v448 = vpop.f32.mrf.mxu0
        %v449 = vadd.f32 %v365, %v448
        %v450 = vpop.f32.mrf.mxu0
        %v451 = vpop.f32.mrf.mxu0
        %v452 = vadd.f32 %v365, %v451
        %v453 = vpop.f32.mrf.mxu0
        %454 = vdwg.mxu0
        %v455 = vmax.f32 %v449, 0.0
        %v456 = vmax.f32 %v452, 0.0
        %v457 = vpack.c.bf16 %v456, %v455
        %v458 = vld [vmem:[#allocation7 + $0x40] sm:$0xf]
        %v459 = vld [vmem:[#allocation7 + $0x44] sm:$0xf]
        %v460 = vld [vmem:[#allocation7 + $0x48] sm:$0xf]
        %v461 = vld [vmem:[#allocation7 + $0x4c] sm:$0xf]
        %v462 = vld [vmem:[#allocation7 + $0x50] sm:$0xf]
        %v463 = vld [vmem:[#allocation7 + $0x54] sm:$0xf]
        %v464 = vld [vmem:[#allocation7 + $0x58] sm:$0xf]
        %v465 = vld [vmem:[#allocation7 + $0x5c] sm:$0xf]
        %v466 = vld [vmem:[#allocation7 + $0x60] sm:$0xf]
        %v467 = vld [vmem:[#allocation7 + $0x64] sm:$0xf]
        %v468 = vld [vmem:[#allocation7 + $0x68] sm:$0xf]
        %v469 = vld [vmem:[#allocation7 + $0x6c] sm:$0xf]
        %v470 = vld [vmem:[#allocation7 + $0x70] sm:$0xf]
        %v471 = vld [vmem:[#allocation7 + $0x74] sm:$0xf]
        %v472 = vld [vmem:[#allocation7 + $0x78] sm:$0xf]
        %v473 = vld [vmem:[#allocation7 + $0x7c] sm:$0xf]
        %v474 = vld [vmem:[#allocation8 + $0x1] sm:$0x1]
        %475 = vmatprep.subr.bf16.mxu0 0
        %476 = vmatpush1.bf16.msra.mxu0 0
        %477 = vmatprep.subr.bf16.mxu0 0
        %478 = vmatpush1.bf16.msra.mxu0 0
        %479 = vmatprep.subr.bf16.mxu0 0
        %480 = vmatpush1.bf16.msra.mxu0 0
        %481 = vmatprep.subr.bf16.mxu0 0
        %482 = vmatpush1.bf16.msra.mxu0 0
        %483 = vmatprep.subr.bf16.mxu0 0
        %484 = vmatpush1.bf16.msra.mxu0 0
        %485 = vmatprep.subr.bf16.mxu0 0
        %486 = vmatpush1.bf16.msra.mxu0 0
        %487 = vmatprep.subr.bf16.mxu0 0
        %488 = vmatpush1.bf16.msra.mxu0 0
        %489 = vmatprep.subr.bf16.mxu0 0
        %490 = vmatpush1.bf16.msra.mxu0 %v457
        %491 = vmatprep.subr.bf16.mxu0 0
        %492 = vmatpush2.bf16.msra.mxu0 0
        %493 = vmatprep.subr.bf16.mxu0 0
        %494 = vmatpush2.bf16.msra.mxu0 0
        %495 = vmatprep.subr.bf16.mxu0 0
        %496 = vmatpush2.bf16.msra.mxu0 0
        %497 = vmatprep.subr.bf16.mxu0 0
        %498 = vmatpush2.bf16.msra.mxu0 0
        %499 = vmatprep.subr.bf16.mxu0 0
        %500 = vmatpush2.bf16.msra.mxu0 0
        %501 = vmatprep.subr.bf16.mxu0 0
        %502 = vmatpush2.bf16.msra.mxu0 0
        %503 = vmatprep.subr.bf16.mxu0 0
        %504 = vmatpush2.bf16.msra.mxu0 0
        %505 = vmatprep.subr.bf16.mxu0 0
        %506 = vmatpush2.bf16.msra.mxu0 0
        %507 = vmatprep.mubr.bf16.mxu0 0
        %508 = vmatmul.mubr.bf16.gmra.mxu0 %v318
        %v509 = vpop.f32.mrf.mxu0
        %v510 = vadd.f32 0.0, %v509
        %v511 = vpop.f32.mrf.mxu0
        %v512 = vpop.f32.mrf.mxu0
        %v513 = vadd.f32 0.0, %v512
        %v514 = vpop.f32.mrf.mxu0
        %515 = vdwg.mxu0
        %v516 = vpack.c.bf16 %v513, %v510
        %v517 = vlaneseq
        %v518 = vshrl.u32 %v517, 7
        %v519 = vsub.s32 0, %v518
        %v520 = vrot.slane %v474, %v519
        %v537 = vunpack.c.l.b16 %v458
        %v538 = vunpack.c.l.b16 %v459
        %v539 = vunpack.c.l.b16 %v460
        %v540 = vunpack.c.l.b16 %v461
        %v541 = vunpack.c.l.b16 %v462
        %v542 = vunpack.c.l.b16 %v463
        %v543 = vunpack.c.l.b16 %v464
        %v544 = vunpack.c.l.b16 %v465
        %v545 = vunpack.c.l.b16 %v466
        %v546 = vunpack.c.l.b16 %v467
        %v547 = vunpack.c.l.b16 %v468
        %v548 = vunpack.c.l.b16 %v469
        %v549 = vunpack.c.l.b16 %v470
        %v550 = vunpack.c.l.b16 %v471
        %v551 = vunpack.c.l.b16 %v472
        %v552 = vunpack.c.l.b16 %v473
        %v553 = vpack.c.b16 %v538, %v537
        %v554 = vpack.c.b16 %v540, %v539
        %v555 = vpack.c.b16 %v542, %v541
        %v556 = vpack.c.b16 %v544, %v543
        %v557 = vpack.c.b16 %v546, %v545
        %v558 = vpack.c.b16 %v548, %v547
        %v559 = vpack.c.b16 %v550, %v549
        %v560 = vpack.c.b16 %v552, %v551
        %569 = vmatprep.subr.bf16.mxu0 0
        %570 = vmatpush1.bf16.msra.mxu0 %v560
        %571 = vmatprep.subr.bf16.mxu0 0
        %572 = vmatpush1.bf16.msra.mxu0 %v559
        %573 = vmatprep.subr.bf16.mxu0 0
        %574 = vmatpush1.bf16.msra.mxu0 %v558
        %575 = vmatprep.subr.bf16.mxu0 0
        %576 = vmatpush1.bf16.msra.mxu0 %v557
        %577 = vmatprep.subr.bf16.mxu0 0
        %578 = vmatpush1.bf16.msra.mxu0 %v556
        %579 = vmatprep.subr.bf16.mxu0 0
        %580 = vmatpush1.bf16.msra.mxu0 %v555
        %581 = vmatprep.subr.bf16.mxu0 0
        %582 = vmatpush1.bf16.msra.mxu0 %v554
        %583 = vmatprep.subr.bf16.mxu0 0
        %584 = vmatpush1.bf16.msra.mxu0 %v553
        %585 = vmatprep.subr.bf16.mxu0 0
        %586 = vmatpush2.bf16.msra.mxu0 0
        %587 = vmatprep.subr.bf16.mxu0 0
        %588 = vmatpush2.bf16.msra.mxu0 0
        %589 = vmatprep.subr.bf16.mxu0 0
        %590 = vmatpush2.bf16.msra.mxu0 0
        %591 = vmatprep.subr.bf16.mxu0 0
        %592 = vmatpush2.bf16.msra.mxu0 0
        %593 = vmatprep.subr.bf16.mxu0 0
        %594 = vmatpush2.bf16.msra.mxu0 0
        %595 = vmatprep.subr.bf16.mxu0 0
        %596 = vmatpush2.bf16.msra.mxu0 0
        %597 = vmatprep.subr.bf16.mxu0 0
        %598 = vmatpush2.bf16.msra.mxu0 0
        %599 = vmatprep.subr.bf16.mxu0 0
        %600 = vmatpush2.bf16.msra.mxu0 0
        %601 = vmatprep.mubr.bf16.mxu0 0
        %602 = vmatmul.mubr.bf16.gmra.mxu0 %v516
        %v603 = vpop.f32.mrf.mxu0
        %v604 = vadd.f32 %v520, %v603
        %v605 = vpop.f32.mrf.mxu0
        %v606 = vpop.f32.mrf.mxu0
        %v607 = vadd.f32 %v520, %v606
        %v608 = vpop.f32.mrf.mxu0
        %609 = vdwg.mxu0
        %v610 = vmax.f32 %v604, 0.0
        %v611 = vmax.f32 %v607, 0.0
        %v612 = vpack.c.bf16 %v611, %v610
        %v613 = vld [vmem:[#allocation7 + $0x80] sm:$0xf]
        %v614 = vld [vmem:[#allocation7 + $0x84] sm:$0xf]
        %v615 = vld [vmem:[#allocation7 + $0x88] sm:$0xf]
        %v616 = vld [vmem:[#allocation7 + $0x8c] sm:$0xf]
        %v617 = vld [vmem:[#allocation7 + $0x90] sm:$0xf]
        %v618 = vld [vmem:[#allocation7 + $0x94] sm:$0xf]
        %v619 = vld [vmem:[#allocation7 + $0x98] sm:$0xf]
        %v620 = vld [vmem:[#allocation7 + $0x9c] sm:$0xf]
        %v621 = vld [vmem:[#allocation7 + $0xa0] sm:$0xf]
        %v622 = vld [vmem:[#allocation7 + $0xa4] sm:$0xf]
        %v623 = vld [vmem:[#allocation7 + $0xa8] sm:$0xf]
        %v624 = vld [vmem:[#allocation7 + $0xac] sm:$0xf]
        %v625 = vld [vmem:[#allocation7 + $0xb0] sm:$0xf]
        %v626 = vld [vmem:[#allocation7 + $0xb4] sm:$0xf]
        %v627 = vld [vmem:[#allocation7 + $0xb8] sm:$0xf]
        %v628 = vld [vmem:[#allocation7 + $0xbc] sm:$0xf]
        %v629 = vld [vmem:[#allocation8 + $0x2] sm:$0x1]
        %630 = vmatprep.subr.bf16.mxu0 0
        %631 = vmatpush1.bf16.msra.mxu0 0
        %632 = vmatprep.subr.bf16.mxu0 0
        %633 = vmatpush1.bf16.msra.mxu0 0
        %634 = vmatprep.subr.bf16.mxu0 0
        %635 = vmatpush1.bf16.msra.mxu0 0
        %636 = vmatprep.subr.bf16.mxu0 0
        %637 = vmatpush1.bf16.msra.mxu0 0
        %638 = vmatprep.subr.bf16.mxu0 0
        %639 = vmatpush1.bf16.msra.mxu0 0
        %640 = vmatprep.subr.bf16.mxu0 0
        %641 = vmatpush1.bf16.msra.mxu0 0
        %642 = vmatprep.subr.bf16.mxu0 0
        %643 = vmatpush1.bf16.msra.mxu0 0
        %644 = vmatprep.subr.bf16.mxu0 0
        %645 = vmatpush1.bf16.msra.mxu0 %v612
        %646 = vmatprep.subr.bf16.mxu0 0
        %647 = vmatpush2.bf16.msra.mxu0 0
        %648 = vmatprep.subr.bf16.mxu0 0
        %649 = vmatpush2.bf16.msra.mxu0 0
        %650 = vmatprep.subr.bf16.mxu0 0
        %651 = vmatpush2.bf16.msra.mxu0 0
        %652 = vmatprep.subr.bf16.mxu0 0
        %653 = vmatpush2.bf16.msra.mxu0 0
        %654 = vmatprep.subr.bf16.mxu0 0
        %655 = vmatpush2.bf16.msra.mxu0 0
        %656 = vmatprep.subr.bf16.mxu0 0
        %657 = vmatpush2.bf16.msra.mxu0 0
        %658 = vmatprep.subr.bf16.mxu0 0
        %659 = vmatpush2.bf16.msra.mxu0 0
        %660 = vmatprep.subr.bf16.mxu0 0
        %661 = vmatpush2.bf16.msra.mxu0 0
        %662 = vmatprep.mubr.bf16.mxu0 0
        %663 = vmatmul.mubr.bf16.gmra.mxu0 %v318
        %v664 = vpop.f32.mrf.mxu0
        %v665 = vadd.f32 0.0, %v664
        %v666 = vpop.f32.mrf.mxu0
        %v667 = vpop.f32.mrf.mxu0
        %v668 = vadd.f32 0.0, %v667
        %v669 = vpop.f32.mrf.mxu0
        %670 = vdwg.mxu0
        %v671 = vpack.c.bf16 %v668, %v665
        %v672 = vlaneseq
        %v673 = vshrl.u32 %v672, 7
        %v674 = vsub.s32 0, %v673
        %v675 = vrot.slane %v629, %v674
        %v692 = vunpack.c.l.b16 %v613
        %v693 = vunpack.c.l.b16 %v614
        %v694 = vunpack.c.l.b16 %v615
        %v695 = vunpack.c.l.b16 %v616
        %v696 = vunpack.c.l.b16 %v617
        %v697 = vunpack.c.l.b16 %v618
        %v698 = vunpack.c.l.b16 %v619
        %v699 = vunpack.c.l.b16 %v620
        %v700 = vunpack.c.l.b16 %v621
        %v701 = vunpack.c.l.b16 %v622
        %v702 = vunpack.c.l.b16 %v623
        %v703 = vunpack.c.l.b16 %v624
        %v704 = vunpack.c.l.b16 %v625
        %v705 = vunpack.c.l.b16 %v626
        %v706 = vunpack.c.l.b16 %v627
        %v707 = vunpack.c.l.b16 %v628
        %v708 = vpack.c.b16 %v693, %v692
        %v709 = vpack.c.b16 %v695, %v694
        %v710 = vpack.c.b16 %v697, %v696
        %v711 = vpack.c.b16 %v699, %v698
        %v712 = vpack.c.b16 %v701, %v700
        %v713 = vpack.c.b16 %v703, %v702
        %v714 = vpack.c.b16 %v705, %v704
        %v715 = vpack.c.b16 %v707, %v706
        %724 = vmatprep.subr.bf16.mxu0 0
        %725 = vmatpush1.bf16.msra.mxu0 %v715
        %726 = vmatprep.subr.bf16.mxu0 0
        %727 = vmatpush1.bf16.msra.mxu0 %v714
        %728 = vmatprep.subr.bf16.mxu0 0
        %729 = vmatpush1.bf16.msra.mxu0 %v713
        %730 = vmatprep.subr.bf16.mxu0 0
        %731 = vmatpush1.bf16.msra.mxu0 %v712
        %732 = vmatprep.subr.bf16.mxu0 0
        %733 = vmatpush1.bf16.msra.mxu0 %v711
        %734 = vmatprep.subr.bf16.mxu0 0
        %735 = vmatpush1.bf16.msra.mxu0 %v710
        %736 = vmatprep.subr.bf16.mxu0 0
        %737 = vmatpush1.bf16.msra.mxu0 %v709
        %738 = vmatprep.subr.bf16.mxu0 0
        %739 = vmatpush1.bf16.msra.mxu0 %v708
        %740 = vmatprep.subr.bf16.mxu0 0
        %741 = vmatpush2.bf16.msra.mxu0 0
        %742 = vmatprep.subr.bf16.mxu0 0
        %743 = vmatpush2.bf16.msra.mxu0 0
        %744 = vmatprep.subr.bf16.mxu0 0
        %745 = vmatpush2.bf16.msra.mxu0 0
        %746 = vmatprep.subr.bf16.mxu0 0
        %747 = vmatpush2.bf16.msra.mxu0 0
        %748 = vmatprep.subr.bf16.mxu0 0
        %749 = vmatpush2.bf16.msra.mxu0 0
        %750 = vmatprep.subr.bf16.mxu0 0
        %751 = vmatpush2.bf16.msra.mxu0 0
        %752 = vmatprep.subr.bf16.mxu0 0
        %753 = vmatpush2.bf16.msra.mxu0 0
        %754 = vmatprep.subr.bf16.mxu0 0
        %755 = vmatpush2.bf16.msra.mxu0 0
        %756 = vmatprep.mubr.bf16.mxu0 0
        %757 = vmatmul.mubr.bf16.gmra.mxu0 %v671
        %v758 = vpop.f32.mrf.mxu0
        %v759 = vadd.f32 %v675, %v758
        %v760 = vpop.f32.mrf.mxu0
        %v761 = vpop.f32.mrf.mxu0
        %v762 = vadd.f32 %v675, %v761
        %v763 = vpop.f32.mrf.mxu0
        %764 = vdwg.mxu0
        %v765 = vmax.f32 %v759, 0.0
        %v766 = vmax.f32 %v762, 0.0
        %v767 = vpack.c.bf16 %v766, %v765
        %v768 = vld [vmem:[#allocation7 + $0xc0] sm:$0xf]
        %v769 = vld [vmem:[#allocation7 + $0xc4] sm:$0xf]
        %v770 = vld [vmem:[#allocation7 + $0xc8] sm:$0xf]
        %v771 = vld [vmem:[#allocation7 + $0xcc] sm:$0xf]
        %v772 = vld [vmem:[#allocation7 + $0xd0] sm:$0xf]
        %v773 = vld [vmem:[#allocation7 + $0xd4] sm:$0xf]
        %v774 = vld [vmem:[#allocation7 + $0xd8] sm:$0xf]
        %v775 = vld [vmem:[#allocation7 + $0xdc] sm:$0xf]
        %v776 = vld [vmem:[#allocation7 + $0xe0] sm:$0xf]
        %v777 = vld [vmem:[#allocation7 + $0xe4] sm:$0xf]
        %v778 = vld [vmem:[#allocation7 + $0xe8] sm:$0xf]
        %v779 = vld [vmem:[#allocation7 + $0xec] sm:$0xf]
        %v780 = vld [vmem:[#allocation7 + $0xf0] sm:$0xf]
        %v781 = vld [vmem:[#allocation7 + $0xf4] sm:$0xf]
        %v782 = vld [vmem:[#allocation7 + $0xf8] sm:$0xf]
        %v783 = vld [vmem:[#allocation7 + $0xfc] sm:$0xf]
        %v784 = vld [vmem:[#allocation8 + $0x3] sm:$0x1]
        %785 = vmatprep.subr.bf16.mxu0 0
        %786 = vmatpush1.bf16.msra.mxu0 0
        %787 = vmatprep.subr.bf16.mxu0 0
        %788 = vmatpush1.bf16.msra.mxu0 0
        %789 = vmatprep.subr.bf16.mxu0 0
        %790 = vmatpush1.bf16.msra.mxu0 0
        %791 = vmatprep.subr.bf16.mxu0 0
        %792 = vmatpush1.bf16.msra.mxu0 0
        %793 = vmatprep.subr.bf16.mxu0 0
        %794 = vmatpush1.bf16.msra.mxu0 0
        %795 = vmatprep.subr.bf16.mxu0 0
        %796 = vmatpush1.bf16.msra.mxu0 0
        %797 = vmatprep.subr.bf16.mxu0 0
        %798 = vmatpush1.bf16.msra.mxu0 0
        %799 = vmatprep.subr.bf16.mxu0 0
        %800 = vmatpush1.bf16.msra.mxu0 %v767
        %801 = vmatprep.subr.bf16.mxu0 0
        %802 = vmatpush2.bf16.msra.mxu0 0
        %803 = vmatprep.subr.bf16.mxu0 0
        %804 = vmatpush2.bf16.msra.mxu0 0
        %805 = vmatprep.subr.bf16.mxu0 0
        %806 = vmatpush2.bf16.msra.mxu0 0
        %807 = vmatprep.subr.bf16.mxu0 0
        %808 = vmatpush2.bf16.msra.mxu0 0
        %809 = vmatprep.subr.bf16.mxu0 0
        %810 = vmatpush2.bf16.msra.mxu0 0
        %811 = vmatprep.subr.bf16.mxu0 0
        %812 = vmatpush2.bf16.msra.mxu0 0
        %813 = vmatprep.subr.bf16.mxu0 0
        %814 = vmatpush2.bf16.msra.mxu0 0
        %815 = vmatprep.subr.bf16.mxu0 0
        %816 = vmatpush2.bf16.msra.mxu0 0
        %817 = vmatprep.mubr.bf16.mxu0 0
        %818 = vmatmul.mubr.bf16.gmra.mxu0 %v318
        %v819 = vpop.f32.mrf.mxu0
        %v820 = vadd.f32 0.0, %v819
        %v821 = vpop.f32.mrf.mxu0
        %v822 = vpop.f32.mrf.mxu0
        %v823 = vadd.f32 0.0, %v822
        %v824 = vpop.f32.mrf.mxu0
        %825 = vdwg.mxu0
        %v826 = vpack.c.bf16 %v823, %v820
        %v827 = vlaneseq
        %v828 = vshrl.u32 %v827, 7
        %v829 = vsub.s32 0, %v828
        %v830 = vrot.slane %v784, %v829
        %v847 = vunpack.c.l.b16 %v768
        %v848 = vunpack.c.l.b16 %v769
        %v849 = vunpack.c.l.b16 %v770
        %v850 = vunpack.c.l.b16 %v771
        %v851 = vunpack.c.l.b16 %v772
        %v852 = vunpack.c.l.b16 %v773
        %v853 = vunpack.c.l.b16 %v774
        %v854 = vunpack.c.l.b16 %v775
        %v855 = vunpack.c.l.b16 %v776
        %v856 = vunpack.c.l.b16 %v777
        %v857 = vunpack.c.l.b16 %v778
        %v858 = vunpack.c.l.b16 %v779
        %v859 = vunpack.c.l.b16 %v780
        %v860 = vunpack.c.l.b16 %v781
        %v861 = vunpack.c.l.b16 %v782
        %v862 = vunpack.c.l.b16 %v783
        %v863 = vpack.c.b16 %v848, %v847
        %v864 = vpack.c.b16 %v850, %v849
        %v865 = vpack.c.b16 %v852, %v851
        %v866 = vpack.c.b16 %v854, %v853
        %v867 = vpack.c.b16 %v856, %v855
        %v868 = vpack.c.b16 %v858, %v857
        %v869 = vpack.c.b16 %v860, %v859
        %v870 = vpack.c.b16 %v862, %v861
        %879 = vmatprep.subr.bf16.mxu0 0
        %880 = vmatpush1.bf16.msra.mxu0 %v870
        %881 = vmatprep.subr.bf16.mxu0 0
        %882 = vmatpush1.bf16.msra.mxu0 %v869
        %883 = vmatprep.subr.bf16.mxu0 0
        %884 = vmatpush1.bf16.msra.mxu0 %v868
        %885 = vmatprep.subr.bf16.mxu0 0
        %886 = vmatpush1.bf16.msra.mxu0 %v867
        %887 = vmatprep.subr.bf16.mxu0 0
        %888 = vmatpush1.bf16.msra.mxu0 %v866
        %889 = vmatprep.subr.bf16.mxu0 0
        %890 = vmatpush1.bf16.msra.mxu0 %v865
        %891 = vmatprep.subr.bf16.mxu0 0
        %892 = vmatpush1.bf16.msra.mxu0 %v864
        %893 = vmatprep.subr.bf16.mxu0 0
        %894 = vmatpush1.bf16.msra.mxu0 %v863
        %895 = vmatprep.subr.bf16.mxu0 0
        %896 = vmatpush2.bf16.msra.mxu0 0
        %897 = vmatprep.subr.bf16.mxu0 0
        %898 = vmatpush2.bf16.msra.mxu0 0
        %899 = vmatprep.subr.bf16.mxu0 0
        %900 = vmatpush2.bf16.msra.mxu0 0
        %901 = vmatprep.subr.bf16.mxu0 0
        %902 = vmatpush2.bf16.msra.mxu0 0
        %903 = vmatprep.subr.bf16.mxu0 0
        %904 = vmatpush2.bf16.msra.mxu0 0
        %905 = vmatprep.subr.bf16.mxu0 0
        %906 = vmatpush2.bf16.msra.mxu0 0
        %907 = vmatprep.subr.bf16.mxu0 0
        %908 = vmatpush2.bf16.msra.mxu0 0
        %909 = vmatprep.subr.bf16.mxu0 0
        %910 = vmatpush2.bf16.msra.mxu0 0
        %911 = vmatprep.mubr.bf16.mxu0 0
        %912 = vmatmul.mubr.bf16.gmra.mxu0 %v826
        %v913 = vpop.f32.mrf.mxu0
        %v914 = vadd.f32 %v830, %v913
        %v915 = vpop.f32.mrf.mxu0
        %v916 = vpop.f32.mrf.mxu0
        %v917 = vadd.f32 %v830, %v916
        %v918 = vpop.f32.mrf.mxu0
        %919 = vdwg.mxu0
        %v920 = vmax.f32 %v914, 0.0
        %v921 = vmax.f32 %v917, 0.0
        %v922 = vmax.f32 %v920, %v921
        %v923 = vrot.slane %v922, 4
        %v924 = vmax.f32 %v922, %v923
        %v925 = vrot.slane %v924, 2
        %v926 = vmax.f32 %v924, %v925
        %v927 = vrot.slane %v926, 1
        %v928 = vmax.f32 %v926, %v927
        %v929 = vld [vmem:[#allocation7 + $0x100] sm:$0xf]
        %v930 = vld [vmem:[#allocation7 + $0x104] sm:$0xf]
        %v931 = vld [vmem:[#allocation7 + $0x108] sm:$0xf]
        %v932 = vld [vmem:[#allocation7 + $0x10c] sm:$0xf]
        %v933 = vld [vmem:[#allocation7 + $0x110] sm:$0xf]
        %v934 = vld [vmem:[#allocation7 + $0x114] sm:$0xf]
        %v935 = vld [vmem:[#allocation7 + $0x118] sm:$0xf]
        %v936 = vld [vmem:[#allocation7 + $0x11c] sm:$0xf]
        %v937 = vld [vmem:[#allocation7 + $0x120] sm:$0xf]
        %v938 = vld [vmem:[#allocation7 + $0x124] sm:$0xf]
        %v939 = vld [vmem:[#allocation7 + $0x128] sm:$0xf]
        %v940 = vld [vmem:[#allocation7 + $0x12c] sm:$0xf]
        %v941 = vld [vmem:[#allocation7 + $0x130] sm:$0xf]
        %v942 = vld [vmem:[#allocation7 + $0x134] sm:$0xf]
        %v943 = vld [vmem:[#allocation7 + $0x138] sm:$0xf]
        %v944 = vld [vmem:[#allocation7 + $0x13c] sm:$0xf]
        %v945 = vld [vmem:[#allocation8 + $0x4] sm:$0x1]
        %v946 = vpack.c.bf16 %v928, %v928
        %v963 = vunpack.c.l.b16 %v929
        %v964 = vunpack.c.l.b16 %v930
        %v965 = vunpack.c.l.b16 %v931
        %v966 = vunpack.c.l.b16 %v932
        %v967 = vunpack.c.l.b16 %v933
        %v968 = vunpack.c.l.b16 %v934
        %v969 = vunpack.c.l.b16 %v935
        %v970 = vunpack.c.l.b16 %v936
        %v971 = vunpack.c.l.b16 %v937
        %v972 = vunpack.c.l.b16 %v938
        %v973 = vunpack.c.l.b16 %v939
        %v974 = vunpack.c.l.b16 %v940
        %v975 = vunpack.c.l.b16 %v941
        %v976 = vunpack.c.l.b16 %v942
        %v977 = vunpack.c.l.b16 %v943
        %v978 = vunpack.c.l.b16 %v944
        %v979 = vpack.c.b16 %v964, %v963
        %v980 = vpack.c.b16 %v966, %v965
        %v981 = vpack.c.b16 %v968, %v967
        %v982 = vpack.c.b16 %v970, %v969
        %v983 = vpack.c.b16 %v972, %v971
        %v984 = vpack.c.b16 %v974, %v973
        %v985 = vpack.c.b16 %v976, %v975
        %v986 = vpack.c.b16 %v978, %v977
        %995 = vmatprep.subr.bf16.mxu0 0
        %996 = vmatpush1.bf16.msra.mxu0 %v986
        %997 = vmatprep.subr.bf16.mxu0 0
        %998 = vmatpush1.bf16.msra.mxu0 %v985
        %999 = vmatprep.subr.bf16.mxu0 0
        %1000 = vmatpush1.bf16.msra.mxu0 %v984
        %1001 = vmatprep.subr.bf16.mxu0 0
        %1002 = vmatpush1.bf16.msra.mxu0 %v983
        %1003 = vmatprep.subr.bf16.mxu0 0
        %1004 = vmatpush1.bf16.msra.mxu0 %v982
        %1005 = vmatprep.subr.bf16.mxu0 0
        %1006 = vmatpush1.bf16.msra.mxu0 %v981
        %1007 = vmatprep.subr.bf16.mxu0 0
        %1008 = vmatpush1.bf16.msra.mxu0 %v980
        %1009 = vmatprep.subr.bf16.mxu0 0
        %1010 = vmatpush1.bf16.msra.mxu0 %v979
        %1011 = vmatprep.subr.bf16.mxu0 0
        %1012 = vmatpush2.bf16.msra.mxu0 0
        %1013 = vmatprep.subr.bf16.mxu0 0
        %1014 = vmatpush2.bf16.msra.mxu0 0
        %1015 = vmatprep.subr.bf16.mxu0 0
        %1016 = vmatpush2.bf16.msra.mxu0 0
        %1017 = vmatprep.subr.bf16.mxu0 0
        %1018 = vmatpush2.bf16.msra.mxu0 0
        %1019 = vmatprep.subr.bf16.mxu0 0
        %1020 = vmatpush2.bf16.msra.mxu0 0
        %1021 = vmatprep.subr.bf16.mxu0 0
        %1022 = vmatpush2.bf16.msra.mxu0 0
        %1023 = vmatprep.subr.bf16.mxu0 0
        %1024 = vmatpush2.bf16.msra.mxu0 0
        %1025 = vmatprep.subr.bf16.mxu0 0
        %1026 = vmatpush2.bf16.msra.mxu0 0
        %1027 = vmatprep.mubr.bf16.mxu0 0
        %1028 = vmatmul.mubr.bf16.gmra.mxu0 %v946
        %v1029 = vpop.f32.mrf.mxu0
        %v1030 = vadd.f32 %v945, %v1029
        %v1031 = vpop.f32.mrf.mxu0
        %v1032 = vpop.f32.mrf.mxu0
        %v1033 = vpop.f32.mrf.mxu0
        %1034 = vdwg.mxu0
        %v1035 = vmax.f32 %v1030, 0.0
        %v1036 = vld [vmem:[#allocation7 + $0x140] sm:$0xf]
        %v1037 = vld [vmem:[#allocation7 + $0x144] sm:$0xf]
        %v1038 = vld [vmem:[#allocation7 + $0x148] sm:$0xf]
        %v1039 = vld [vmem:[#allocation7 + $0x14c] sm:$0xf]
        %v1040 = vld [vmem:[#allocation7 + $0x150] sm:$0xf]
        %v1041 = vld [vmem:[#allocation7 + $0x154] sm:$0xf]
        %v1042 = vld [vmem:[#allocation7 + $0x158] sm:$0xf]
        %v1043 = vld [vmem:[#allocation7 + $0x15c] sm:$0xf]
        %v1044 = vld [vmem:[#allocation7 + $0x160] sm:$0xf]
        %v1045 = vld [vmem:[#allocation7 + $0x164] sm:$0xf]
        %v1046 = vld [vmem:[#allocation7 + $0x168] sm:$0xf]
        %v1047 = vld [vmem:[#allocation7 + $0x16c] sm:$0xf]
        %v1048 = vld [vmem:[#allocation7 + $0x170] sm:$0xf]
        %v1049 = vld [vmem:[#allocation7 + $0x174] sm:$0xf]
        %v1050 = vld [vmem:[#allocation7 + $0x178] sm:$0xf]
        %v1051 = vld [vmem:[#allocation7 + $0x17c] sm:$0xf]
        %v1052 = vld [vmem:[#allocation8 + $0x5] sm:$0x1]
        %v1053 = vpack.c.bf16 %v1035, %v1035
        %v1070 = vunpack.c.l.b16 %v1036
        %v1071 = vunpack.c.l.b16 %v1037
        %v1072 = vunpack.c.l.b16 %v1038
        %v1073 = vunpack.c.l.b16 %v1039
        %v1074 = vunpack.c.l.b16 %v1040
        %v1075 = vunpack.c.l.b16 %v1041
        %v1076 = vunpack.c.l.b16 %v1042
        %v1077 = vunpack.c.l.b16 %v1043
        %v1078 = vunpack.c.l.b16 %v1044
        %v1079 = vunpack.c.l.b16 %v1045
        %v1080 = vunpack.c.l.b16 %v1046
        %v1081 = vunpack.c.l.b16 %v1047
        %v1082 = vunpack.c.l.b16 %v1048
        %v1083 = vunpack.c.l.b16 %v1049
        %v1084 = vunpack.c.l.b16 %v1050
        %v1085 = vunpack.c.l.b16 %v1051
        %v1086 = vpack.c.b16 %v1071, %v1070
        %v1087 = vpack.c.b16 %v1073, %v1072
        %v1088 = vpack.c.b16 %v1075, %v1074
        %v1089 = vpack.c.b16 %v1077, %v1076
        %v1090 = vpack.c.b16 %v1079, %v1078
        %v1091 = vpack.c.b16 %v1081, %v1080
        %v1092 = vpack.c.b16 %v1083, %v1082
        %v1093 = vpack.c.b16 %v1085, %v1084
        %1102 = vmatprep.subr.bf16.mxu0 0
        %1103 = vmatpush1.bf16.msra.mxu0 %v1093
        %1104 = vmatprep.subr.bf16.mxu0 0
        %1105 = vmatpush1.bf16.msra.mxu0 %v1092
        %1106 = vmatprep.subr.bf16.mxu0 0
        %1107 = vmatpush1.bf16.msra.mxu0 %v1091
        %1108 = vmatprep.subr.bf16.mxu0 0
        %1109 = vmatpush1.bf16.msra.mxu0 %v1090
        %1110 = vmatprep.subr.bf16.mxu0 0
        %1111 = vmatpush1.bf16.msra.mxu0 %v1089
        %1112 = vmatprep.subr.bf16.mxu0 0
        %1113 = vmatpush1.bf16.msra.mxu0 %v1088
        %1114 = vmatprep.subr.bf16.mxu0 0
        %1115 = vmatpush1.bf16.msra.mxu0 %v1087
        %1116 = vmatprep.subr.bf16.mxu0 0
        %1117 = vmatpush1.bf16.msra.mxu0 %v1086
        %1118 = vmatprep.subr.bf16.mxu0 0
        %1119 = vmatpush2.bf16.msra.mxu0 0
        %1120 = vmatprep.subr.bf16.mxu0 0
        %1121 = vmatpush2.bf16.msra.mxu0 0
        %1122 = vmatprep.subr.bf16.mxu0 0
        %1123 = vmatpush2.bf16.msra.mxu0 0
        %1124 = vmatprep.subr.bf16.mxu0 0
        %1125 = vmatpush2.bf16.msra.mxu0 0
        %1126 = vmatprep.subr.bf16.mxu0 0
        %1127 = vmatpush2.bf16.msra.mxu0 0
        %1128 = vmatprep.subr.bf16.mxu0 0
        %1129 = vmatpush2.bf16.msra.mxu0 0
        %1130 = vmatprep.subr.bf16.mxu0 0
        %1131 = vmatpush2.bf16.msra.mxu0 0
        %1132 = vmatprep.subr.bf16.mxu0 0
        %1133 = vmatpush2.bf16.msra.mxu0 0
        %1134 = vmatprep.mubr.bf16.mxu0 0
        %1135 = vmatmul.mubr.bf16.gmra.mxu0 %v1053
        %v1136 = vpop.f32.mrf.mxu0
        %v1137 = vadd.f32 %v1052, %v1136
        %v1138 = vpop.f32.mrf.mxu0
        %v1139 = vpop.f32.mrf.mxu0
        %v1140 = vpop.f32.mrf.mxu0
        %1141 = vdwg.mxu0
        %v1142 = vmax.f32 %v1137, 0.0
        %v1143 = vld [vmem:[#allocation7 + $0x180] sm:$0xf]
        %v1144 = vld [vmem:[#allocation7 + $0x184] sm:$0xf]
        %v1145 = vld [vmem:[#allocation7 + $0x188] sm:$0xf]
        %v1146 = vld [vmem:[#allocation7 + $0x18c] sm:$0xf]
        %v1147 = vld [vmem:[#allocation7 + $0x190] sm:$0xf]
        %v1148 = vld [vmem:[#allocation7 + $0x194] sm:$0xf]
        %v1149 = vld [vmem:[#allocation7 + $0x198] sm:$0xf]
        %v1150 = vld [vmem:[#allocation7 + $0x19c] sm:$0xf]
        %v1151 = vld [vmem:[#allocation7 + $0x1a0] sm:$0xf]
        %v1152 = vld [vmem:[#allocation7 + $0x1a4] sm:$0xf]
        %v1153 = vld [vmem:[#allocation7 + $0x1a8] sm:$0xf]
        %v1154 = vld [vmem:[#allocation7 + $0x1ac] sm:$0xf]
        %v1155 = vld [vmem:[#allocation7 + $0x1b0] sm:$0xf]
        %v1156 = vld [vmem:[#allocation7 + $0x1b4] sm:$0xf]
        %v1157 = vld [vmem:[#allocation7 + $0x1b8] sm:$0xf]
        %v1158 = vld [vmem:[#allocation7 + $0x1bc] sm:$0xf]
        %v1159 = vld [vmem:[#allocation8 + $0x6] sm:$0x1]
        %v1160 = vpack.c.bf16 %v1142, %v1142
        %v1177 = vunpack.c.l.b16 %v1143
        %v1178 = vunpack.c.l.b16 %v1144
        %v1179 = vunpack.c.l.b16 %v1145
        %v1180 = vunpack.c.l.b16 %v1146
        %v1181 = vunpack.c.l.b16 %v1147
        %v1182 = vunpack.c.l.b16 %v1148
        %v1183 = vunpack.c.l.b16 %v1149
        %v1184 = vunpack.c.l.b16 %v1150
        %v1185 = vunpack.c.l.b16 %v1151
        %v1186 = vunpack.c.l.b16 %v1152
        %v1187 = vunpack.c.l.b16 %v1153
        %v1188 = vunpack.c.l.b16 %v1154
        %v1189 = vunpack.c.l.b16 %v1155
        %v1190 = vunpack.c.l.b16 %v1156
        %v1191 = vunpack.c.l.b16 %v1157
        %v1192 = vunpack.c.l.b16 %v1158
        %v1193 = vpack.c.b16 %v1178, %v1177
        %v1194 = vpack.c.b16 %v1180, %v1179
        %v1195 = vpack.c.b16 %v1182, %v1181
        %v1196 = vpack.c.b16 %v1184, %v1183
        %v1197 = vpack.c.b16 %v1186, %v1185
        %v1198 = vpack.c.b16 %v1188, %v1187
        %v1199 = vpack.c.b16 %v1190, %v1189
        %v1200 = vpack.c.b16 %v1192, %v1191
        %1209 = vmatprep.subr.bf16.mxu0 0
        %1210 = vmatpush1.bf16.msra.mxu0 %v1200
        %1211 = vmatprep.subr.bf16.mxu0 0
        %1212 = vmatpush1.bf16.msra.mxu0 %v1199
        %1213 = vmatprep.subr.bf16.mxu0 0
        %1214 = vmatpush1.bf16.msra.mxu0 %v1198
        %1215 = vmatprep.subr.bf16.mxu0 0
        %1216 = vmatpush1.bf16.msra.mxu0 %v1197
        %1217 = vmatprep.subr.bf16.mxu0 0
        %1218 = vmatpush1.bf16.msra.mxu0 %v1196
        %1219 = vmatprep.subr.bf16.mxu0 0
        %1220 = vmatpush1.bf16.msra.mxu0 %v1195
        %1221 = vmatprep.subr.bf16.mxu0 0
        %1222 = vmatpush1.bf16.msra.mxu0 %v1194
        %1223 = vmatprep.subr.bf16.mxu0 0
        %1224 = vmatpush1.bf16.msra.mxu0 %v1193
        %1225 = vmatprep.subr.bf16.mxu0 0
        %1226 = vmatpush2.bf16.msra.mxu0 0
        %1227 = vmatprep.subr.bf16.mxu0 0
        %1228 = vmatpush2.bf16.msra.mxu0 0
        %1229 = vmatprep.subr.bf16.mxu0 0
        %1230 = vmatpush2.bf16.msra.mxu0 0
        %1231 = vmatprep.subr.bf16.mxu0 0
        %1232 = vmatpush2.bf16.msra.mxu0 0
        %1233 = vmatprep.subr.bf16.mxu0 0
        %1234 = vmatpush2.bf16.msra.mxu0 0
        %1235 = vmatprep.subr.bf16.mxu0 0
        %1236 = vmatpush2.bf16.msra.mxu0 0
        %1237 = vmatprep.subr.bf16.mxu0 0
        %1238 = vmatpush2.bf16.msra.mxu0 0
        %1239 = vmatprep.subr.bf16.mxu0 0
        %1240 = vmatpush2.bf16.msra.mxu0 0
        %1241 = vmatprep.mubr.bf16.mxu0 0
        %1242 = vmatmul.mubr.bf16.gmra.mxu0 %v1160
        %v1243 = vpop.f32.mrf.mxu0
        %v1244 = vadd.f32 %v1159, %v1243
        %v1245 = vpop.f32.mrf.mxu0
        %v1246 = vpop.f32.mrf.mxu0
        %v1247 = vpop.f32.mrf.mxu0
        %1248 = vdwg.mxu0
        %v1249 = vmax.f32 %v1244, 0.0
        %v1250 = vld [vmem:[#allocation7 + $0x1c0] sm:$0xf]
        %v1251 = vld [vmem:[#allocation7 + $0x1c4] sm:$0xf]
        %v1252 = vld [vmem:[#allocation7 + $0x1c8] sm:$0xf]
        %v1253 = vld [vmem:[#allocation7 + $0x1cc] sm:$0xf]
        %v1254 = vld [vmem:[#allocation7 + $0x1d0] sm:$0xf]
        %v1255 = vld [vmem:[#allocation7 + $0x1d4] sm:$0xf]
        %v1256 = vld [vmem:[#allocation7 + $0x1d8] sm:$0xf]
        %v1257 = vld [vmem:[#allocation7 + $0x1dc] sm:$0xf]
        %v1258 = vld [vmem:[#allocation7 + $0x1e0] sm:$0xf]
        %v1259 = vld [vmem:[#allocation7 + $0x1e4] sm:$0xf]
        %v1260 = vld [vmem:[#allocation7 + $0x1e8] sm:$0xf]
        %v1261 = vld [vmem:[#allocation7 + $0x1ec] sm:$0xf]
        %v1262 = vld [vmem:[#allocation7 + $0x1f0] sm:$0xf]
        %v1263 = vld [vmem:[#allocation7 + $0x1f4] sm:$0xf]
        %v1264 = vld [vmem:[#allocation7 + $0x1f8] sm:$0xf]
        %v1265 = vld [vmem:[#allocation7 + $0x1fc] sm:$0xf]
        %v1266 = vld [vmem:[#allocation8 + $0x7] sm:$0x1]
        %v1267 = vpack.c.bf16 %v1249, %v1249
        %v1284 = vunpack.c.l.b16 %v1250
        %v1285 = vunpack.c.l.b16 %v1251
        %v1286 = vunpack.c.l.b16 %v1252
        %v1287 = vunpack.c.l.b16 %v1253
        %v1288 = vunpack.c.l.b16 %v1254
        %v1289 = vunpack.c.l.b16 %v1255
        %v1290 = vunpack.c.l.b16 %v1256
        %v1291 = vunpack.c.l.b16 %v1257
        %v1292 = vunpack.c.l.b16 %v1258
        %v1293 = vunpack.c.l.b16 %v1259
        %v1294 = vunpack.c.l.b16 %v1260
        %v1295 = vunpack.c.l.b16 %v1261
        %v1296 = vunpack.c.l.b16 %v1262
        %v1297 = vunpack.c.l.b16 %v1263
        %v1298 = vunpack.c.l.b16 %v1264
        %v1299 = vunpack.c.l.b16 %v1265
        %v1300 = vpack.c.b16 %v1285, %v1284
        %v1301 = vpack.c.b16 %v1287, %v1286
        %v1302 = vpack.c.b16 %v1289, %v1288
        %v1303 = vpack.c.b16 %v1291, %v1290
        %v1304 = vpack.c.b16 %v1293, %v1292
        %v1305 = vpack.c.b16 %v1295, %v1294
        %v1306 = vpack.c.b16 %v1297, %v1296
        %v1307 = vpack.c.b16 %v1299, %v1298
        %1316 = vmatprep.subr.bf16.mxu0 0
        %1317 = vmatpush1.bf16.msra.mxu0 %v1307
        %1318 = vmatprep.subr.bf16.mxu0 0
        %1319 = vmatpush1.bf16.msra.mxu0 %v1306
        %1320 = vmatprep.subr.bf16.mxu0 0
        %1321 = vmatpush1.bf16.msra.mxu0 %v1305
        %1322 = vmatprep.subr.bf16.mxu0 0
        %1323 = vmatpush1.bf16.msra.mxu0 %v1304
        %1324 = vmatprep.subr.bf16.mxu0 0
        %1325 = vmatpush1.bf16.msra.mxu0 %v1303
        %1326 = vmatprep.subr.bf16.mxu0 0
        %1327 = vmatpush1.bf16.msra.mxu0 %v1302
        %1328 = vmatprep.subr.bf16.mxu0 0
        %1329 = vmatpush1.bf16.msra.mxu0 %v1301
        %1330 = vmatprep.subr.bf16.mxu0 0
        %1331 = vmatpush1.bf16.msra.mxu0 %v1300
        %1332 = vmatprep.subr.bf16.mxu0 0
        %1333 = vmatpush2.bf16.msra.mxu0 0
        %1334 = vmatprep.subr.bf16.mxu0 0
        %1335 = vmatpush2.bf16.msra.mxu0 0
        %1336 = vmatprep.subr.bf16.mxu0 0
        %1337 = vmatpush2.bf16.msra.mxu0 0
        %1338 = vmatprep.subr.bf16.mxu0 0
        %1339 = vmatpush2.bf16.msra.mxu0 0
        %1340 = vmatprep.subr.bf16.mxu0 0
        %1341 = vmatpush2.bf16.msra.mxu0 0
        %1342 = vmatprep.subr.bf16.mxu0 0
        %1343 = vmatpush2.bf16.msra.mxu0 0
        %1344 = vmatprep.subr.bf16.mxu0 0
        %1345 = vmatpush2.bf16.msra.mxu0 0
        %1346 = vmatprep.subr.bf16.mxu0 0
        %1347 = vmatpush2.bf16.msra.mxu0 0
        %1348 = vmatprep.mubr.bf16.mxu0 0
        %1349 = vmatmul.mubr.bf16.gmra.mxu0 %v1267
        %v1350 = vpop.f32.mrf.mxu0
        %v1351 = vadd.f32 %v1266, %v1350
        %v1352 = vpop.f32.mrf.mxu0
        %v1353 = vpop.f32.mrf.mxu0
        %v1354 = vpop.f32.mrf.mxu0
        %1355 = vdwg.mxu0
        %v1356 = vlaneseq
        %v1357 = vshrl.u32 %v1356, 7
        %v1358 = vsub.s32 0, %v1357
        %v1359 = vrot.slane %v1351, %v1358
        %1360 = vst [vmem:[%s282] sm:$0xff] %v1359
        %s1361 = sand.u32 %s127, 1
        %s1362 = scalar_lea.sflag [#allocation4], %s1361
        %s1363 = sand.u32 %s127, 1
        %s1364 = smul.addr %s1363, 8
        %s1365 = scalar_lea.vmem [#allocation10], %s1364
        // Predicated region
        $region53: #{tpu_custom_call.1} parent=35 // pred_check
          %p1366 = pneg %p137
        $region54: #{tpu_custom_call.1} parent=35 // pred_check_branch
          %1368 = sbr.rel (%p1366) target = $region56
        $region55: #{tpu_custom_call.1} parent=35 // pred_region
          %s1370 = ssub.s32 128, 128
          %1371 = vsyncadd %s1362, %s1370
          %s1372 = smul.addr %s25, 128
          %s1373 = scalar_lea.hbm %s4, %s1372
          %s1375 = sshll.u32 %s1365, 4
          %s1376 = int_to_ptr.vmem [resolvable:$true] %s1375
          %1378 = dma.vmem_to_hbm [thread:$0]  %s1376, 128, %s1373, %s1362
        $region56: #{tpu_custom_call.1} parent=35 // pred_fallthru
          _
      $region36: #{tpu_custom_call.1} parent=5 // pred_fallthru
        _
      %p1379 = scmp.le.s32.totalorder 2, %s20
      // Predicated region
      $region57: #{tpu_custom_call.1} parent=5 // pred_check
        %p1380 = pneg %p1379
      $region58: #{tpu_custom_call.1} parent=5 // pred_check_branch
        %1382 = sbr.rel (%p1380) target = $region60
      $region59: #{tpu_custom_call.1} parent=5 // pred_region
        %s1383 = ssub.s32 %s20, 2
        // Predicated region
        $region61: #{tpu_custom_call.1} parent=59 // pred_check
          %p1384 = pneg %p143
        $region62: #{tpu_custom_call.1} parent=59 // pred_check_branch
          %1386 = sbr.rel (%p1384) target = $region64
        $region63: #{tpu_custom_call.1} parent=59 // pred_region
          %s1387 = sand.u32 %s128, 1
          %s1388 = scalar_lea.sflag [#allocation4], %s1387
          %s1389 = sand.u32 %s128, 1
          %s1390 = smul.addr %s1389, 8
          %s1391 = scalar_lea.vmem [#allocation10], %s1390
          %1392 = dma.done %s1388, 128
        $region64: #{tpu_custom_call.1} parent=59 // pred_fallthru
          _
      $region60: #{tpu_custom_call.1} parent=5 // pred_fallthru
        _
    $region6: #{tpu_custom_call.1} parent=1 // loop_footer
      %s24 = sadd.s32 1, %s20
    $region7: #{tpu_custom_call.1} parent=1 // loop_footer_branch
      %19 = sbr.rel target = $region3
    $region8: #{tpu_custom_call.1} parent=1 // loop_exit
      _
    %1393 = vsyncpa [#allocation3], 1
    %s1394 = scalar_lea.sflag [#allocation3], 1
    %1395 = vsyncpa %s1394, 1
    %1396 = vsyncpa [#allocation6], 1
    %s1397 = scalar_lea.sflag [#allocation6], 1
    %1398 = vsyncpa %s1397, 1
    %1399 = vsyncpa [#allocation9], 1
    %1400 = vsyncpa [#allocation4], 1
    %s1401 = scalar_lea.sflag [#allocation4], 1
    %1402 = vsyncpa %s1401, 1

</llo_original>
